<compile_context>
chip_gen: v7x
topology: tpu7x:2x2x1
jax: 0.10.0
libtpu: 0.0.40
codegen_flags: <defaults>
</compile_context>

<pallas_src>
from typing import NamedTuple

import jax
import jax.numpy as jnp
from jax.experimental import pallas as pl
from jax.experimental.pallas import tpu as pltpu

# ----------------------------- configuration --------------------------------
N_CNN = 2
KERNEL_SIZE = [3, 2]
POOL = 2
OUT_CHANNEL = [4, 8]
N_DENSE = 2
N_TENSOR_DENSE = [32, 16]
N_LABELS = 5
N_VOCAB = 50
EMBEDDING_DIM = 16
B = 2          # batch
S = 8          # sequence length


class _ConvGeom(NamedTuple):
    H: int      # input height (== output height, 'same')
    W: int      # input width  (== output width,  'same')
    Cin: int
    Cout: int
    kh: int
    kw: int
    Hp: int     # padded height
    Wp: int     # padded width
    ph: int     # left pad (height)
    pw: int     # left pad (width)


def _conv_geometry():
    geoms = []
    h, w, cin = S, EMBEDDING_DIM, 1
    for l in range(N_CNN):
        kh, kw = KERNEL_SIZE[l], EMBEDDING_DIM        # module: kernel=(k_i, embedding_dim)
        assert h % POOL == 0 and w % POOL == 0
        geoms.append(_ConvGeom(H=h, W=w, Cin=cin, Cout=OUT_CHANNEL[l], kh=kh, kw=kw,
                               Hp=h + kh - 1, Wp=w + kw - 1,
                               ph=(kh - 1) // 2, pw=(kw - 1) // 2))
        h //= POOL
        w //= POOL
        cin = OUT_CHANNEL[l]
    return tuple(geoms)


_GEOM = _conv_geometry()


# ----------------------------- the fused kernel -------------------------------
def _fused_forward_kernel(*refs):
    # ---- unpack (inputs, outputs, scratch) by static position ----
    pos = 0
    emb_ref = refs[pos]; pos += 1                     # (B*S, E) f32
    labels_ref = refs[pos]; pos += 1                  # (B, 1)  i32
    bands, brows = [], []
    for l in range(N_CNN):
        kh = KERNEL_SIZE[l]
        bands.append([refs[pos + d] for d in range(kh)])
        pos += kh
        brows.append(refs[pos]); pos += 1             # (1, W*Cout) tiled conv bias
    dws, dbs = [], []
    for _ in range(N_DENSE + 1):
        dws.append(refs[pos]); dbs.append(refs[pos + 1]); pos += 2
    probs_ref = refs[pos]; loss_ref = refs[pos + 1]; pos += 2
    pads = [refs[pos + l] for l in range(N_CNN)]      # padded activation scratches

    # Zero the padded scratches: the 'same' zero padding lives here.
    for l in range(N_CNN):
        pads[l][...] = jnp.zeros_like(pads[l])

    labels = labels_ref[...]                                            # (B, 1) i32
    lane_iota = jax.lax.broadcasted_iota(jnp.int32, (1, N_LABELS), 1)

    nll_sum = jnp.zeros((1, 1), jnp.float32)

    for b in range(B):
        g0 = _GEOM[0]
        # embedding rows (Cin=1, channel-last) -> interior of layer-0 padded slab
        pads[0][b * g0.Hp + g0.ph: b * g0.Hp + g0.ph + g0.H,
                g0.pw: g0.pw + g0.W] = emb_ref[b * g0.H: (b + 1) * g0.H, :]

        z0 = jnp.zeros((1, N_TENSOR_DENSE[0]), jnp.float32)

        for l in range(N_CNN):
            g = _GEOM[l]
            # ---- Conv2d('same') as kh accumulated matmuls against band matrices ----
            acc = None
            for dh in range(g.kh):
                slab = pads[l][b * g.Hp + dh: b * g.Hp + dh + g.H, :]    # (H, Wp*Cin)
                part = jnp.dot(slab, bands[l][dh][...],
                               preferred_element_type=jnp.float32)       # (H, W*Cout)
                acc = part if acc is None else acc + part
            acc = acc + brows[l][...]                                    # conv bias
            acc = acc * jax.nn.sigmoid(acc)                              # SiLU (Dropout = id)

            # ---- MaxPool2d(POOL) ----
            # Output columns were pre-grouped by (w % POOL), so the width pool is a
            # max over POOL contiguous lane-dense halves; the height pool is a max
            # over POOL adjacent rows.
            half = (g.W // POOL) * g.Cout
            wmax = acc[:, 0:half]
            for p in range(1, POOL):
                wmax = jnp.maximum(wmax, acc[:, p * half:(p + 1) * half])  # (H, half)
            for h2 in range(g.H // POOL):
                row = wmax[POOL * h2: POOL * h2 + 1, :]
                for i in range(1, POOL):
                    row = jnp.maximum(row, wmax[POOL * h2 + i: POOL * h2 + i + 1, :])
                if l + 1 < N_CNN:
                    gn = _GEOM[l + 1]
                    r = b * gn.Hp + gn.ph + h2
                    c = gn.pw * gn.Cin
                    pads[l + 1][r: r + 1, c: c + half] = row
                else:
                    # Flatten + first dense layer, accumulated per pooled row.
                    # (dws[0] rows were pre-permuted to (h, w, c) order.)
                    z0 = z0 + jnp.dot(row, dws[0][h2 * half: (h2 + 1) * half, :],
                                      preferred_element_type=jnp.float32)

        # ---- dense head (per example) ----
        z = z0 + dbs[0][...]
        z = z * jax.nn.sigmoid(z)                                        # SiLU
        for i in range(1, N_DENSE):
            z = jnp.dot(z, dws[i][...], preferred_element_type=jnp.float32) + dbs[i][...]
            z = z * jax.nn.sigmoid(z)
        logits = (jnp.dot(z, dws[N_DENSE][...], preferred_element_type=jnp.float32)
                  + dbs[N_DENSE][...])                                   # (1, n_labels)

        # nn.Softmax() over the label axis
        m = jnp.max(logits, axis=-1, keepdims=True)
        e = jnp.exp(logits - m)
        probs = e / jnp.sum(e, axis=-1, keepdims=True)
        probs_ref[b:b + 1, :] = probs

        # nn.CrossEntropyLoss applied to the softmaxed output (the module chains them)
        m2 = jnp.max(probs, axis=-1, keepdims=True)
        lse = jnp.log(jnp.sum(jnp.exp(probs - m2), axis=-1, keepdims=True)) + m2
        onehot = (lane_iota == labels[b:b + 1, :]).astype(jnp.float32)
        picked = jnp.sum(probs * onehot, axis=-1, keepdims=True)
        nll_sum = nll_sum + (lse - picked)

    loss_ref[...] = nll_sum * (1.0 / B)


# ----------------------- weight-only preprocessing (once) ---------------------
def _band_matrices(conv_w, w_in):
    """Per-dh (Wp*Cin, W*Cout) matmul operands for Conv2d(padding='same').

    band[dh][wp*Cin + ci, col(w, co)] = conv_w[co, ci, dh, wp - w]  (0 <= wp-w < kw),
    with output columns grouped by (w % POOL) so the kernel's width max-pool is a
    max of POOL contiguous halves.
    """
    cout, cin, kh, kw = conv_w.shape
    wp = w_in + kw - 1
    eye = jnp.eye(w_in, dtype=jnp.float32)
    mats = []
    for dh in range(kh):
        m = jnp.zeros((wp * cin, w_in * cout), jnp.float32)
        for dw in range(kw):
            blk = conv_w[:, :, dh, dw].T                                  # (Cin, Cout)
            diag = jnp.kron(eye, blk)                                     # (W*Cin, W*Cout)
            m = m + jnp.pad(diag, ((dw * cin, (kw - 1 - dw) * cin), (0, 0)))
        m = m.reshape(wp * cin, w_in // POOL, POOL, cout)
        m = m.transpose(0, 2, 1, 3).reshape(wp * cin, w_in * cout)        # group by w % POOL
        mats.append(m)
    return mats


def prepare_params(params):
    """Run once: band matrices, tiled conv biases, (c,h,w)->(h,w,c) permutation of
    the first dense weight.  Pure weight-side preprocessing (no activation glue)."""
    kin = []
    h, w, cin = S, EMBEDDING_DIM, 1
    for l in range(N_CNN):
        kin += _band_matrices(params["conv_w"][l], w)
        kin.append(jnp.tile(params["conv_b"][l], w).reshape(1, w * OUT_CHANNEL[l]))
        h //= POOL
        w //= POOL
        cin = OUT_CHANNEL[l]
    w0 = params["dense_w"][0]                                             # rows in (c,h,w) order
    w0 = w0.reshape(cin, h, w, -1).transpose(1, 2, 0, 3).reshape(cin * h * w, -1)
    kin += [w0, params["dense_b"][0].reshape(1, -1)]
    for i in range(1, N_DENSE + 1):
        kin += [params["dense_w"][i], params["dense_b"][i].reshape(1, -1)]
    return {"embedding": params["embedding"], "kernel_inputs": tuple(kin)}


# ----------------------------- model forward ---------------------------------
def cnn_cls_forward(prep, token_ids, labels):
    emb = prep["embedding"][token_ids]                      # (B, S, E) embedding gather (glue)
    emb2d = emb.reshape(B * S, EMBEDDING_DIM)
    labels2d = labels.reshape(B, 1).astype(jnp.int32)
    probs, loss = pl.pallas_call(
        _fused_forward_kernel,
        out_shape=(jax.ShapeDtypeStruct((B, N_LABELS), jnp.float32),
                   jax.ShapeDtypeStruct((1, 1), jnp.float32)),
        scratch_shapes=[pltpu.VMEM((B * g.Hp, g.Wp * g.Cin), jnp.float32) for g in _GEOM],
    )(emb2d, labels2d, *prep["kernel_inputs"])
    return loss[0, 0], probs


# ----------------------------- parameter init --------------------------------
def init_params(key):
    ks = jax.random.split(key, 16)
    emb = jax.random.normal(ks[0], (N_VOCAB, EMBEDDING_DIM), jnp.float32) * 0.1
    emb = emb.at[0].set(0.0)                      # padding_idx=0 row is zeros
    conv_w, conv_b = [], []
    cin = 1
    for i in range(N_CNN):
        conv_w.append(jax.random.normal(ks[1 + i], (OUT_CHANNEL[i], cin, KERNEL_SIZE[i],
                                                    EMBEDDING_DIM), jnp.float32) * 0.1)
        conv_b.append(jax.random.normal(ks[5 + i], (OUT_CHANNEL[i],), jnp.float32) * 0.01)
        cin = OUT_CHANNEL[i]
    h, w = S, EMBEDDING_DIM
    for _ in range(N_CNN):
        h, w = h // POOL, w // POOL
    flat = cin * h * w                            # LazyLinear in_features
    dims = [flat] + N_TENSOR_DENSE + [N_LABELS]
    dense_w, dense_b = [], []
    for i in range(len(dims) - 1):
        dense_w.append(jax.random.normal(ks[9 + i], (dims[i], dims[i + 1]), jnp.float32) * 0.1)
        dense_b.append(jax.random.normal(ks[12 + i], (dims[i + 1],), jnp.float32) * 0.01)
    return dict(embedding=emb, conv_w=conv_w, conv_b=conv_b,
                dense_w=dense_w, dense_b=dense_b)


# -------------------------- plain-JAX reference (check) -----------------------
def _reference_forward(params, token_ids, labels):
    emb = params["embedding"][token_ids]          # (B, S, E)
    x = emb[:, None, :, :]                        # (B, 1, S, E) NCHW
    for i in range(N_CNN):
        w = params["conv_w"][i]
        bcv = params["conv_b"][i]
        cout, cin, kh, kw = w.shape
        bb, _, hh, ww = x.shape
        xp = jnp.pad(x, ((0, 0), (0, 0),
                         ((kh - 1) // 2, kh - 1 - (kh - 1) // 2),
                         ((kw - 1) // 2, kw - 1 - (kw - 1) // 2)))
        cols = []
        for dh in range(kh):
            for dw in range(kw):
                cols.append(xp[:, :, dh:dh + hh, dw:dw + ww])
        col = jnp.stack(cols, axis=2)                                  # (B, Cin, kh*kw, H, W)
        col = col.transpose(0, 3, 4, 1, 2).reshape(bb * hh * ww, cin * kh * kw)
        y = col @ w.reshape(cout, cin * kh * kw).T + bcv
        y = y * jax.nn.sigmoid(y)
        y = y.reshape(bb, hh, ww, cout).transpose(0, 3, 1, 2)
        hq, wq = hh // POOL, ww // POOL
        y = y[:, :, :hq * POOL, :wq * POOL].reshape(bb, cout, hq, POOL, wq, POOL)
        x = jnp.max(y, axis=(3, 5))
    h = x.reshape(x.shape[0], -1)
    for i in range(N_DENSE + 1):
        h = h @ params["dense_w"][i] + params["dense_b"][i]
        if i < N_DENSE:
            h = h * jax.nn.sigmoid(h)
    probs = jax.nn.softmax(h, axis=-1)
    lse = jax.nn.logsumexp(probs, axis=-1)
    picked = jnp.take_along_axis(probs, labels[:, None], axis=-1)[:, 0]
    return jnp.mean(lse - picked), probs


# TODO(synk): LabelSmoothingCrossEntropyLoss class is not defined in the reference source;
#             the default use_label_smoothing=False (nn.CrossEntropyLoss) path is implemented.

if __name__ == "__main__":
    key = jax.random.PRNGKey(0)
    pkey, tkey, lkey = jax.random.split(key, 3)
    params = init_params(pkey)
    prep = prepare_params(params)                 # weight-only prep, runs once
    token_ids = jax.random.randint(tkey, (B, S), 0, N_VOCAB, dtype=jnp.int32)
    labels = jax.random.randint(lkey, (B,), 0, N_LABELS, dtype=jnp.int32)

    loss, probs = jax.jit(cnn_cls_forward)(prep, token_ids, labels)
    jax.block_until_ready((loss, probs))

    ref_loss, ref_probs = _reference_forward(params, token_ids, labels)
    assert probs.shape == (B, N_LABELS)
    assert loss.shape == ()
    assert jnp.allclose(probs, ref_probs, atol=1e-3, rtol=1e-3)
    assert jnp.allclose(loss, ref_loss, atol=1e-3, rtol=1e-3)
    print("KERNEL_OK")
</pallas_src>

<mosaic_0001>
module attributes {stable_mosaic.version = 11 : i64} {
  func.func @_fused_forward_kernel(%arg0: memref<16x16xf32, #tpu.memory_space<vmem>>, %arg1: memref<2x1xi32, #tpu.memory_space<vmem>>, %arg2: memref<31x64xf32, #tpu.memory_space<vmem>>, %arg3: memref<31x64xf32, #tpu.memory_space<vmem>>, %arg4: memref<31x64xf32, #tpu.memory_space<vmem>>, %arg5: memref<1x64xf32, #tpu.memory_space<vmem>>, %arg6: memref<92x64xf32, #tpu.memory_space<vmem>>, %arg7: memref<92x64xf32, #tpu.memory_space<vmem>>, %arg8: memref<1x64xf32, #tpu.memory_space<vmem>>, %arg9: memref<64x32xf32, #tpu.memory_space<vmem>>, %arg10: memref<1x32xf32, #tpu.memory_space<vmem>>, %arg11: memref<32x16xf32, #tpu.memory_space<vmem>>, %arg12: memref<1x16xf32, #tpu.memory_space<vmem>>, %arg13: memref<16x5xf32, #tpu.memory_space<vmem>>, %arg14: memref<1x5xf32, #tpu.memory_space<vmem>>, %arg15: memref<2x5xf32, #tpu.memory_space<vmem>>, %arg16: memref<1x1xf32, #tpu.memory_space<vmem>>, %arg17: memref<20x31xf32, #tpu.memory_space<vmem>>, %arg18: memref<10x92xf32, #tpu.memory_space<vmem>>) attributes {dimension_semantics = [], scalar_prefetch = 0 : i64, scratch_operands = 2 : i64, tpu.core_type = #tpu.core_type<tc>} {
    %cst = arith.constant 0.000000e+00 : f32
    %0 = vector.broadcast %cst : f32 to vector<20x31xf32>
    %c0 = arith.constant 0 : index
    %c0_0 = arith.constant 0 : index
    %1 = vector.load %arg17[%c0, %c0_0] : memref<20x31xf32, #tpu.memory_space<vmem>>, vector<20x31xf32>
    tpu.vector_store %arg17[%c0, %c0_0], %0 {strides = array<i32>} : memref<20x31xf32, #tpu.memory_space<vmem>>, vector<20x31xf32>,
    %cst_1 = arith.constant 0.000000e+00 : f32
    %2 = vector.broadcast %cst_1 : f32 to vector<10x92xf32>
    %c0_2 = arith.constant 0 : index
    %c0_3 = arith.constant 0 : index
    %3 = vector.load %arg18[%c0_2, %c0_3] : memref<10x92xf32, #tpu.memory_space<vmem>>, vector<10x92xf32>
    tpu.vector_store %arg18[%c0_2, %c0_3], %2 {strides = array<i32>} : memref<10x92xf32, #tpu.memory_space<vmem>>, vector<10x92xf32>,
    %c0_4 = arith.constant 0 : index
    %c0_5 = arith.constant 0 : index
    %4 = vector.load %arg1[%c0_4, %c0_5] : memref<2x1xi32, #tpu.memory_space<vmem>>, vector<2x1xi32>
    %5 = tpu.iota {dimensions = array<i32: 1>} : vector<1x5xi32>
    %cst_6 = arith.constant 0.000000e+00 : f32
    %6 = vector.broadcast %cst_6 : f32 to vector<1x1xf32>
    %c0_7 = arith.constant 0 : index
    %c0_8 = arith.constant 0 : index
    %7 = vector.load %arg0[%c0_7, %c0_8] : memref<16x16xf32, #tpu.memory_space<vmem>>, vector<8x16xf32>
    %c1 = arith.constant 1 : index
    %c7 = arith.constant 7 : index
    %8 = vector.load %arg17[%c1, %c7] : memref<20x31xf32, #tpu.memory_space<vmem>>, vector<8x16xf32>
    tpu.vector_store %arg17[%c1, %c7], %7 {strides = array<i32>} : memref<20x31xf32, #tpu.memory_space<vmem>>, vector<8x16xf32>,
    %cst_9 = arith.constant 0.000000e+00 : f32
    %9 = vector.broadcast %cst_9 : f32 to vector<1x32xf32>
    %c0_10 = arith.constant 0 : index
    %c0_11 = arith.constant 0 : index
    %10 = vector.load %arg17[%c0_10, %c0_11] : memref<20x31xf32, #tpu.memory_space<vmem>>, vector<8x31xf32>
    %c0_12 = arith.constant 0 : index
    %c0_13 = arith.constant 0 : index
    %11 = vector.load %arg2[%c0_12, %c0_13] : memref<31x64xf32, #tpu.memory_space<vmem>>, vector<31x64xf32>
    %cst_14 = arith.constant dense<0.000000e+00> : vector<8x64xf32>
    %12 = tpu.matmul %10, %11, %cst_14 {dimension_numbers = #tpu.dot_dimension_numbers<[1], [0], [0], [1], [0, 0, 1, 1], [], []>} : vector<8x31xf32>, vector<31x64xf32>, vector<8x64xf32> -> vector<8x64xf32>
    %c1_15 = arith.constant 1 : index
    %c0_16 = arith.constant 0 : index
    %13 = vector.load %arg17[%c1_15, %c0_16] : memref<20x31xf32, #tpu.memory_space<vmem>>, vector<8x31xf32>
    %c0_17 = arith.constant 0 : index
    %c0_18 = arith.constant 0 : index
    %14 = vector.load %arg3[%c0_17, %c0_18] : memref<31x64xf32, #tpu.memory_space<vmem>>, vector<31x64xf32>
    %cst_19 = arith.constant dense<0.000000e+00> : vector<8x64xf32>
    %15 = tpu.matmul %13, %14, %cst_19 {dimension_numbers = #tpu.dot_dimension_numbers<[1], [0], [0], [1], [0, 0, 1, 1], [], []>} : vector<8x31xf32>, vector<31x64xf32>, vector<8x64xf32> -> vector<8x64xf32>
    %16 = arith.addf %12, %15 : vector<8x64xf32>
    %c2 = arith.constant 2 : index
    %c0_20 = arith.constant 0 : index
    %17 = vector.load %arg17[%c2, %c0_20] : memref<20x31xf32, #tpu.memory_space<vmem>>, vector<8x31xf32>
    %c0_21 = arith.constant 0 : index
    %c0_22 = arith.constant 0 : index
    %18 = vector.load %arg4[%c0_21, %c0_22] : memref<31x64xf32, #tpu.memory_space<vmem>>, vector<31x64xf32>
    %cst_23 = arith.constant dense<0.000000e+00> : vector<8x64xf32>
    %19 = tpu.matmul %17, %18, %cst_23 {dimension_numbers = #tpu.dot_dimension_numbers<[1], [0], [0], [1], [0, 0, 1, 1], [], []>} : vector<8x31xf32>, vector<31x64xf32>, vector<8x64xf32> -> vector<8x64xf32>
    %20 = arith.addf %16, %19 : vector<8x64xf32>
    %c0_24 = arith.constant 0 : index
    %c0_25 = arith.constant 0 : index
    %21 = vector.load %arg5[%c0_24, %c0_25] : memref<1x64xf32, #tpu.memory_space<vmem>>, vector<1x64xf32>
    %22 = vector.broadcast %21 : vector<1x64xf32> to vector<8x64xf32>
    %23 = arith.addf %20, %22 : vector<8x64xf32>
    %24 = arith.negf %23 : vector<8x64xf32>
    %25 = math.exp %24 : vector<8x64xf32>
    %cst_26 = arith.constant 1.000000e+00 : f32
    %26 = vector.broadcast %cst_26 : f32 to vector<8x64xf32>
    %27 = arith.addf %26, %25 : vector<8x64xf32>
    %28 = arith.divf %26, %27 : vector<8x64xf32>
    %29 = arith.mulf %23, %28 : vector<8x64xf32>
    %30 = vector.extract_strided_slice %29 {offsets = [0, 0], sizes = [8, 32], strides = [1, 1]} : vector<8x64xf32> to vector<8x32xf32>
    %31 = vector.extract_strided_slice %29 {offsets = [0, 32], sizes = [8, 32], strides = [1, 1]} : vector<8x64xf32> to vector<8x32xf32>
    %32 = arith.maximumf %30, %31 : vector<8x32xf32>
    %33 = vector.extract_strided_slice %32 {offsets = [0, 0], sizes = [1, 32], strides = [1, 1]} : vector<8x32xf32> to vector<1x32xf32>
    %34 = vector.extract_strided_slice %32 {offsets = [1, 0], sizes = [1, 32], strides = [1, 1]} : vector<8x32xf32> to vector<1x32xf32>
    %35 = arith.maximumf %33, %34 : vector<1x32xf32>
    %c0_27 = arith.constant 0 : index
    %c28 = arith.constant 28 : index
    %36 = vector.load %arg18[%c0_27, %c28] : memref<10x92xf32, #tpu.memory_space<vmem>>, vector<1x32xf32>
    tpu.vector_store %arg18[%c0_27, %c28], %35 {strides = array<i32>} : memref<10x92xf32, #tpu.memory_space<vmem>>, vector<1x32xf32>,
    %37 = vector.extract_strided_slice %32 {offsets = [2, 0], sizes = [1, 32], strides = [1, 1]} : vector<8x32xf32> to vector<1x32xf32>
    %38 = vector.extract_strided_slice %32 {offsets = [3, 0], sizes = [1, 32], strides = [1, 1]} : vector<8x32xf32> to vector<1x32xf32>
    %39 = arith.maximumf %37, %38 : vector<1x32xf32>
    %c1_28 = arith.constant 1 : index
    %c28_29 = arith.constant 28 : index
    %40 = vector.load %arg18[%c1_28, %c28_29] : memref<10x92xf32, #tpu.memory_space<vmem>>, vector<1x32xf32>
    tpu.vector_store %arg18[%c1_28, %c28_29], %39 {strides = array<i32>} : memref<10x92xf32, #tpu.memory_space<vmem>>, vector<1x32xf32>,
    %41 = vector.extract_strided_slice %32 {offsets = [4, 0], sizes = [1, 32], strides = [1, 1]} : vector<8x32xf32> to vector<1x32xf32>
    %42 = vector.extract_strided_slice %32 {offsets = [5, 0], sizes = [1, 32], strides = [1, 1]} : vector<8x32xf32> to vector<1x32xf32>
    %43 = arith.maximumf %41, %42 : vector<1x32xf32>
    %c2_30 = arith.constant 2 : index
    %c28_31 = arith.constant 28 : index
    %44 = vector.load %arg18[%c2_30, %c28_31] : memref<10x92xf32, #tpu.memory_space<vmem>>, vector<1x32xf32>
    tpu.vector_store %arg18[%c2_30, %c28_31], %43 {strides = array<i32>} : memref<10x92xf32, #tpu.memory_space<vmem>>, vector<1x32xf32>,
    %45 = vector.extract_strided_slice %32 {offsets = [6, 0], sizes = [1, 32], strides = [1, 1]} : vector<8x32xf32> to vector<1x32xf32>
    %46 = vector.extract_strided_slice %32 {offsets = [7, 0], sizes = [1, 32], strides = [1, 1]} : vector<8x32xf32> to vector<1x32xf32>
    %47 = arith.maximumf %45, %46 : vector<1x32xf32>
    %c3 = arith.constant 3 : index
    %c28_32 = arith.constant 28 : index
    %48 = vector.load %arg18[%c3, %c28_32] : memref<10x92xf32, #tpu.memory_space<vmem>>, vector<1x32xf32>
    tpu.vector_store %arg18[%c3, %c28_32], %47 {strides = array<i32>} : memref<10x92xf32, #tpu.memory_space<vmem>>, vector<1x32xf32>,
    %c0_33 = arith.constant 0 : index
    %c0_34 = arith.constant 0 : index
    %49 = vector.load %arg18[%c0_33, %c0_34] : memref<10x92xf32, #tpu.memory_space<vmem>>, vector<4x92xf32>
    %c0_35 = arith.constant 0 : index
    %c0_36 = arith.constant 0 : index
    %50 = vector.load %arg6[%c0_35, %c0_36] : memref<92x64xf32, #tpu.memory_space<vmem>>, vector<92x64xf32>
    %cst_37 = arith.constant dense<0.000000e+00> : vector<4x64xf32>
    %51 = tpu.matmul %49, %50, %cst_37 {dimension_numbers = #tpu.dot_dimension_numbers<[1], [0], [0], [1], [0, 0, 1, 1], [], []>} : vector<4x92xf32>, vector<92x64xf32>, vector<4x64xf32> -> vector<4x64xf32>
    %c1_38 = arith.constant 1 : index
    %c0_39 = arith.constant 0 : index
    %52 = vector.load %arg18[%c1_38, %c0_39] : memref<10x92xf32, #tpu.memory_space<vmem>>, vector<4x92xf32>
    %c0_40 = arith.constant 0 : index
    %c0_41 = arith.constant 0 : index
    %53 = vector.load %arg7[%c0_40, %c0_41] : memref<92x64xf32, #tpu.memory_space<vmem>>, vector<92x64xf32>
    %cst_42 = arith.constant dense<0.000000e+00> : vector<4x64xf32>
    %54 = tpu.matmul %52, %53, %cst_42 {dimension_numbers = #tpu.dot_dimension_numbers<[1], [0], [0], [1], [0, 0, 1, 1], [], []>} : vector<4x92xf32>, vector<92x64xf32>, vector<4x64xf32> -> vector<4x64xf32>
    %55 = arith.addf %51, %54 : vector<4x64xf32>
    %c0_43 = arith.constant 0 : index
    %c0_44 = arith.constant 0 : index
    %56 = vector.load %arg8[%c0_43, %c0_44] : memref<1x64xf32, #tpu.memory_space<vmem>>, vector<1x64xf32>
    %57 = vector.broadcast %56 : vector<1x64xf32> to vector<4x64xf32>
    %58 = arith.addf %55, %57 : vector<4x64xf32>
    %59 = arith.negf %58 : vector<4x64xf32>
    %60 = math.exp %59 : vector<4x64xf32>
    %cst_45 = arith.constant 1.000000e+00 : f32
    %61 = vector.broadcast %cst_45 : f32 to vector<4x64xf32>
    %62 = arith.addf %61, %60 : vector<4x64xf32>
    %63 = arith.divf %61, %62 : vector<4x64xf32>
    %64 = arith.mulf %58, %63 : vector<4x64xf32>
    %65 = vector.extract_strided_slice %64 {offsets = [0, 0], sizes = [4, 32], strides = [1, 1]} : vector<4x64xf32> to vector<4x32xf32>
    %66 = vector.extract_strided_slice %64 {offsets = [0, 32], sizes = [4, 32], strides = [1, 1]} : vector<4x64xf32> to vector<4x32xf32>
    %67 = arith.maximumf %65, %66 : vector<4x32xf32>
    %68 = vector.extract_strided_slice %67 {offsets = [0, 0], sizes = [1, 32], strides = [1, 1]} : vector<4x32xf32> to vector<1x32xf32>
    %69 = vector.extract_strided_slice %67 {offsets = [1, 0], sizes = [1, 32], strides = [1, 1]} : vector<4x32xf32> to vector<1x32xf32>
    %70 = arith.maximumf %68, %69 : vector<1x32xf32>
    %c0_46 = arith.constant 0 : index
    %c0_47 = arith.constant 0 : index
    %71 = vector.load %arg9[%c0_46, %c0_47] : memref<64x32xf32, #tpu.memory_space<vmem>>, vector<32x32xf32>
    %cst_48 = arith.constant dense<0.000000e+00> : vector<1x32xf32>
    %72 = tpu.matmul %70, %71, %cst_48 {dimension_numbers = #tpu.dot_dimension_numbers<[1], [0], [0], [1], [0, 0, 1, 1], [], []>} : vector<1x32xf32>, vector<32x32xf32>, vector<1x32xf32> -> vector<1x32xf32>
    %73 = arith.addf %9, %72 : vector<1x32xf32>
    %74 = vector.extract_strided_slice %67 {offsets = [2, 0], sizes = [1, 32], strides = [1, 1]} : vector<4x32xf32> to vector<1x32xf32>
    %75 = vector.extract_strided_slice %67 {offsets = [3, 0], sizes = [1, 32], strides = [1, 1]} : vector<4x32xf32> to vector<1x32xf32>
    %76 = arith.maximumf %74, %75 : vector<1x32xf32>
    %c32 = arith.constant 32 : index
    %c0_49 = arith.constant 0 : index
    %77 = vector.load %arg9[%c32, %c0_49] : memref<64x32xf32, #tpu.memory_space<vmem>>, vector<32x32xf32>
    %cst_50 = arith.constant dense<0.000000e+00> : vector<1x32xf32>
    %78 = tpu.matmul %76, %77, %cst_50 {dimension_numbers = #tpu.dot_dimension_numbers<[1], [0], [0], [1], [0, 0, 1, 1], [], []>} : vector<1x32xf32>, vector<32x32xf32>, vector<1x32xf32> -> vector<1x32xf32>
    %79 = arith.addf %73, %78 : vector<1x32xf32>
    %c0_51 = arith.constant 0 : index
    %c0_52 = arith.constant 0 : index
    %80 = vector.load %arg10[%c0_51, %c0_52] : memref<1x32xf32, #tpu.memory_space<vmem>>, vector<1x32xf32>
    %81 = arith.addf %79, %80 : vector<1x32xf32>
    %82 = arith.negf %81 : vector<1x32xf32>
    %83 = math.exp %82 : vector<1x32xf32>
    %cst_53 = arith.constant 1.000000e+00 : f32
    %84 = vector.broadcast %cst_53 : f32 to vector<1x32xf32>
    %85 = arith.addf %84, %83 : vector<1x32xf32>
    %86 = arith.divf %84, %85 : vector<1x32xf32>
    %87 = arith.mulf %81, %86 : vector<1x32xf32>
    %c0_54 = arith.constant 0 : index
    %c0_55 = arith.constant 0 : index
    %88 = vector.load %arg11[%c0_54, %c0_55] : memref<32x16xf32, #tpu.memory_space<vmem>>, vector<32x16xf32>
    %cst_56 = arith.constant dense<0.000000e+00> : vector<1x16xf32>
    %89 = tpu.matmul %87, %88, %cst_56 {dimension_numbers = #tpu.dot_dimension_numbers<[1], [0], [0], [1], [0, 0, 1, 1], [], []>} : vector<1x32xf32>, vector<32x16xf32>, vector<1x16xf32> -> vector<1x16xf32>
    %c0_57 = arith.constant 0 : index
    %c0_58 = arith.constant 0 : index
    %90 = vector.load %arg12[%c0_57, %c0_58] : memref<1x16xf32, #tpu.memory_space<vmem>>, vector<1x16xf32>
    %91 = arith.addf %89, %90 : vector<1x16xf32>
    %92 = arith.negf %91 : vector<1x16xf32>
    %93 = math.exp %92 : vector<1x16xf32>
    %cst_59 = arith.constant 1.000000e+00 : f32
    %94 = vector.broadcast %cst_59 : f32 to vector<1x16xf32>
    %95 = arith.addf %94, %93 : vector<1x16xf32>
    %96 = arith.divf %94, %95 : vector<1x16xf32>
    %97 = arith.mulf %91, %96 : vector<1x16xf32>
    %c0_60 = arith.constant 0 : index
    %c0_61 = arith.constant 0 : index
    %98 = vector.load %arg13[%c0_60, %c0_61] : memref<16x5xf32, #tpu.memory_space<vmem>>, vector<16x5xf32>
    %cst_62 = arith.constant dense<0.000000e+00> : vector<1x5xf32>
    %99 = tpu.matmul %97, %98, %cst_62 {dimension_numbers = #tpu.dot_dimension_numbers<[1], [0], [0], [1], [0, 0, 1, 1], [], []>} : vector<1x16xf32>, vector<16x5xf32>, vector<1x5xf32> -> vector<1x5xf32>
    %c0_63 = arith.constant 0 : index
    %c0_64 = arith.constant 0 : index
    %100 = vector.load %arg14[%c0_63, %c0_64] : memref<1x5xf32, #tpu.memory_space<vmem>>, vector<1x5xf32>
    %101 = arith.addf %99, %100 : vector<1x5xf32>
    %cst_65 = arith.constant dense<0xFF800000> : vector<1xf32>
    %102 = vector.multi_reduction <maximumf>, %101, %cst_65 [1] : vector<1x5xf32> to vector<1xf32>
    %103 = vector.shape_cast %102 : vector<1xf32> to vector<1x1xf32>
    %104 = vector.broadcast %103 : vector<1x1xf32> to vector<1x5xf32>
    %105 = arith.subf %101, %104 : vector<1x5xf32>
    %106 = math.exp %105 : vector<1x5xf32>
    %cst_66 = arith.constant dense<0.000000e+00> : vector<1xf32>
    %107 = vector.multi_reduction <add>, %106, %cst_66 [1] : vector<1x5xf32> to vector<1xf32>
    %108 = vector.shape_cast %107 : vector<1xf32> to vector<1x1xf32>
    %109 = vector.broadcast %108 : vector<1x1xf32> to vector<1x5xf32>
    %110 = arith.divf %106, %109 : vector<1x5xf32>
    %c0_67 = arith.constant 0 : index
    %c0_68 = arith.constant 0 : index
    %111 = vector.load %arg15[%c0_67, %c0_68] : memref<2x5xf32, #tpu.memory_space<vmem>>, vector<1x5xf32>
    tpu.vector_store %arg15[%c0_67, %c0_68], %110 {strides = array<i32>} : memref<2x5xf32, #tpu.memory_space<vmem>>, vector<1x5xf32>,
    %cst_69 = arith.constant dense<0xFF800000> : vector<1xf32>
    %112 = vector.multi_reduction <maximumf>, %110, %cst_69 [1] : vector<1x5xf32> to vector<1xf32>
    %113 = vector.shape_cast %112 : vector<1xf32> to vector<1x1xf32>
    %114 = vector.broadcast %113 : vector<1x1xf32> to vector<1x5xf32>
    %115 = arith.subf %110, %114 : vector<1x5xf32>
    %116 = math.exp %115 : vector<1x5xf32>
    %cst_70 = arith.constant dense<0.000000e+00> : vector<1xf32>
    %117 = vector.multi_reduction <add>, %116, %cst_70 [1] : vector<1x5xf32> to vector<1xf32>
    %118 = vector.shape_cast %117 : vector<1xf32> to vector<1x1xf32>
    %119 = math.log %118 : vector<1x1xf32>
    %120 = arith.addf %119, %113 : vector<1x1xf32>
    %121 = vector.extract_strided_slice %4 {offsets = [0, 0], sizes = [1, 1], strides = [1, 1]} : vector<2x1xi32> to vector<1x1xi32>
    %122 = vector.broadcast %121 : vector<1x1xi32> to vector<1x5xi32>
    %123 = arith.cmpi eq, %5, %122 : vector<1x5xi32>
    %124 = arith.extui %123 : vector<1x5xi1> to vector<1x5xi32>
    %125 = arith.sitofp %124 : vector<1x5xi32> to vector<1x5xf32>
    %126 = arith.mulf %110, %125 : vector<1x5xf32>
    %cst_71 = arith.constant dense<0.000000e+00> : vector<1xf32>
    %127 = vector.multi_reduction <add>, %126, %cst_71 [1] : vector<1x5xf32> to vector<1xf32>
    %128 = vector.shape_cast %127 : vector<1xf32> to vector<1x1xf32>
    %129 = arith.subf %120, %128 : vector<1x1xf32>
    %130 = arith.addf %6, %129 : vector<1x1xf32>
    %c8 = arith.constant 8 : index
    %c0_72 = arith.constant 0 : index
    %131 = vector.load %arg0[%c8, %c0_72] : memref<16x16xf32, #tpu.memory_space<vmem>>, vector<8x16xf32>
    %c11 = arith.constant 11 : index
    %c7_73 = arith.constant 7 : index
    %132 = vector.load %arg17[%c11, %c7_73] : memref<20x31xf32, #tpu.memory_space<vmem>>, vector<8x16xf32>
    tpu.vector_store %arg17[%c11, %c7_73], %131 {strides = array<i32>} : memref<20x31xf32, #tpu.memory_space<vmem>>, vector<8x16xf32>,
    %cst_74 = arith.constant 0.000000e+00 : f32
    %133 = vector.broadcast %cst_74 : f32 to vector<1x32xf32>
    %c10 = arith.constant 10 : index
    %c0_75 = arith.constant 0 : index
    %134 = vector.load %arg17[%c10, %c0_75] : memref<20x31xf32, #tpu.memory_space<vmem>>, vector<8x31xf32>
    %c0_76 = arith.constant 0 : index
    %c0_77 = arith.constant 0 : index
    %135 = vector.load %arg2[%c0_76, %c0_77] : memref<31x64xf32, #tpu.memory_space<vmem>>, vector<31x64xf32>
    %cst_78 = arith.constant dense<0.000000e+00> : vector<8x64xf32>
    %136 = tpu.matmul %134, %135, %cst_78 {dimension_numbers = #tpu.dot_dimension_numbers<[1], [0], [0], [1], [0, 0, 1, 1], [], []>} : vector<8x31xf32>, vector<31x64xf32>, vector<8x64xf32> -> vector<8x64xf32>
    %c11_79 = arith.constant 11 : index
    %c0_80 = arith.constant 0 : index
    %137 = vector.load %arg17[%c11_79, %c0_80] : memref<20x31xf32, #tpu.memory_space<vmem>>, vector<8x31xf32>
    %c0_81 = arith.constant 0 : index
    %c0_82 = arith.constant 0 : index
    %138 = vector.load %arg3[%c0_81, %c0_82] : memref<31x64xf32, #tpu.memory_space<vmem>>, vector<31x64xf32>
    %cst_83 = arith.constant dense<0.000000e+00> : vector<8x64xf32>
    %139 = tpu.matmul %137, %138, %cst_83 {dimension_numbers = #tpu.dot_dimension_numbers<[1], [0], [0], [1], [0, 0, 1, 1], [], []>} : vector<8x31xf32>, vector<31x64xf32>, vector<8x64xf32> -> vector<8x64xf32>
    %140 = arith.addf %136, %139 : vector<8x64xf32>
    %c12 = arith.constant 12 : index
    %c0_84 = arith.constant 0 : index
    %141 = vector.load %arg17[%c12, %c0_84] : memref<20x31xf32, #tpu.memory_space<vmem>>, vector<8x31xf32>
    %c0_85 = arith.constant 0 : index
    %c0_86 = arith.constant 0 : index
    %142 = vector.load %arg4[%c0_85, %c0_86] : memref<31x64xf32, #tpu.memory_space<vmem>>, vector<31x64xf32>
    %cst_87 = arith.constant dense<0.000000e+00> : vector<8x64xf32>
    %143 = tpu.matmul %141, %142, %cst_87 {dimension_numbers = #tpu.dot_dimension_numbers<[1], [0], [0], [1], [0, 0, 1, 1], [], []>} : vector<8x31xf32>, vector<31x64xf32>, vector<8x64xf32> -> vector<8x64xf32>
    %144 = arith.addf %140, %143 : vector<8x64xf32>
    %c0_88 = arith.constant 0 : index
    %c0_89 = arith.constant 0 : index
    %145 = vector.load %arg5[%c0_88, %c0_89] : memref<1x64xf32, #tpu.memory_space<vmem>>, vector<1x64xf32>
    %146 = vector.broadcast %145 : vector<1x64xf32> to vector<8x64xf32>
    %147 = arith.addf %144, %146 : vector<8x64xf32>
    %148 = arith.negf %147 : vector<8x64xf32>
    %149 = math.exp %148 : vector<8x64xf32>
    %cst_90 = arith.constant 1.000000e+00 : f32
    %150 = vector.broadcast %cst_90 : f32 to vector<8x64xf32>
    %151 = arith.addf %150, %149 : vector<8x64xf32>
    %152 = arith.divf %150, %151 : vector<8x64xf32>
    %153 = arith.mulf %147, %152 : vector<8x64xf32>
    %154 = vector.extract_strided_slice %153 {offsets = [0, 0], sizes = [8, 32], strides = [1, 1]} : vector<8x64xf32> to vector<8x32xf32>
    %155 = vector.extract_strided_slice %153 {offsets = [0, 32], sizes = [8, 32], strides = [1, 1]} : vector<8x64xf32> to vector<8x32xf32>
    %156 = arith.maximumf %154, %155 : vector<8x32xf32>
    %157 = vector.extract_strided_slice %156 {offsets = [0, 0], sizes = [1, 32], strides = [1, 1]} : vector<8x32xf32> to vector<1x32xf32>
    %158 = vector.extract_strided_slice %156 {offsets = [1, 0], sizes = [1, 32], strides = [1, 1]} : vector<8x32xf32> to vector<1x32xf32>
    %159 = arith.maximumf %157, %158 : vector<1x32xf32>
    %c5 = arith.constant 5 : index
    %c28_91 = arith.constant 28 : index
    %160 = vector.load %arg18[%c5, %c28_91] : memref<10x92xf32, #tpu.memory_space<vmem>>, vector<1x32xf32>
    tpu.vector_store %arg18[%c5, %c28_91], %159 {strides = array<i32>} : memref<10x92xf32, #tpu.memory_space<vmem>>, vector<1x32xf32>,
    %161 = vector.extract_strided_slice %156 {offsets = [2, 0], sizes = [1, 32], strides = [1, 1]} : vector<8x32xf32> to vector<1x32xf32>
    %162 = vector.extract_strided_slice %156 {offsets = [3, 0], sizes = [1, 32], strides = [1, 1]} : vector<8x32xf32> to vector<1x32xf32>
    %163 = arith.maximumf %161, %162 : vector<1x32xf32>
    %c6 = arith.constant 6 : index
    %c28_92 = arith.constant 28 : index
    %164 = vector.load %arg18[%c6, %c28_92] : memref<10x92xf32, #tpu.memory_space<vmem>>, vector<1x32xf32>
    tpu.vector_store %arg18[%c6, %c28_92], %163 {strides = array<i32>} : memref<10x92xf32, #tpu.memory_space<vmem>>, vector<1x32xf32>,
    %165 = vector.extract_strided_slice %156 {offsets = [4, 0], sizes = [1, 32], strides = [1, 1]} : vector<8x32xf32> to vector<1x32xf32>
    %166 = vector.extract_strided_slice %156 {offsets = [5, 0], sizes = [1, 32], strides = [1, 1]} : vector<8x32xf32> to vector<1x32xf32>
    %167 = arith.maximumf %165, %166 : vector<1x32xf32>
    %c7_93 = arith.constant 7 : index
    %c28_94 = arith.constant 28 : index
    %168 = vector.load %arg18[%c7_93, %c28_94] : memref<10x92xf32, #tpu.memory_space<vmem>>, vector<1x32xf32>
    tpu.vector_store %arg18[%c7_93, %c28_94], %167 {strides = array<i32>} : memref<10x92xf32, #tpu.memory_space<vmem>>, vector<1x32xf32>,
    %169 = vector.extract_strided_slice %156 {offsets = [6, 0], sizes = [1, 32], strides = [1, 1]} : vector<8x32xf32> to vector<1x32xf32>
    %170 = vector.extract_strided_slice %156 {offsets = [7, 0], sizes = [1, 32], strides = [1, 1]} : vector<8x32xf32> to vector<1x32xf32>
    %171 = arith.maximumf %169, %170 : vector<1x32xf32>
    %c8_95 = arith.constant 8 : index
    %c28_96 = arith.constant 28 : index
    %172 = vector.load %arg18[%c8_95, %c28_96] : memref<10x92xf32, #tpu.memory_space<vmem>>, vector<1x32xf32>
    tpu.vector_store %arg18[%c8_95, %c28_96], %171 {strides = array<i32>} : memref<10x92xf32, #tpu.memory_space<vmem>>, vector<1x32xf32>,
    %c5_97 = arith.constant 5 : index
    %c0_98 = arith.constant 0 : index
    %173 = vector.load %arg18[%c5_97, %c0_98] : memref<10x92xf32, #tpu.memory_space<vmem>>, vector<4x92xf32>
    %c0_99 = arith.constant 0 : index
    %c0_100 = arith.constant 0 : index
    %174 = vector.load %arg6[%c0_99, %c0_100] : memref<92x64xf32, #tpu.memory_space<vmem>>, vector<92x64xf32>
    %cst_101 = arith.constant dense<0.000000e+00> : vector<4x64xf32>
    %175 = tpu.matmul %173, %174, %cst_101 {dimension_numbers = #tpu.dot_dimension_numbers<[1], [0], [0], [1], [0, 0, 1, 1], [], []>} : vector<4x92xf32>, vector<92x64xf32>, vector<4x64xf32> -> vector<4x64xf32>
    %c6_102 = arith.constant 6 : index
    %c0_103 = arith.constant 0 : index
    %176 = vector.load %arg18[%c6_102, %c0_103] : memref<10x92xf32, #tpu.memory_space<vmem>>, vector<4x92xf32>
    %c0_104 = arith.constant 0 : index
    %c0_105 = arith.constant 0 : index
    %177 = vector.load %arg7[%c0_104, %c0_105] : memref<92x64xf32, #tpu.memory_space<vmem>>, vector<92x64xf32>
    %cst_106 = arith.constant dense<0.000000e+00> : vector<4x64xf32>
    %178 = tpu.matmul %176, %177, %cst_106 {dimension_numbers = #tpu.dot_dimension_numbers<[1], [0], [0], [1], [0, 0, 1, 1], [], []>} : vector<4x92xf32>, vector<92x64xf32>, vector<4x64xf32> -> vector<4x64xf32>
    %179 = arith.addf %175, %178 : vector<4x64xf32>
    %c0_107 = arith.constant 0 : index
    %c0_108 = arith.constant 0 : index
    %180 = vector.load %arg8[%c0_107, %c0_108] : memref<1x64xf32, #tpu.memory_space<vmem>>, vector<1x64xf32>
    %181 = vector.broadcast %180 : vector<1x64xf32> to vector<4x64xf32>
    %182 = arith.addf %179, %181 : vector<4x64xf32>
    %183 = arith.negf %182 : vector<4x64xf32>
    %184 = math.exp %183 : vector<4x64xf32>
    %cst_109 = arith.constant 1.000000e+00 : f32
    %185 = vector.broadcast %cst_109 : f32 to vector<4x64xf32>
    %186 = arith.addf %185, %184 : vector<4x64xf32>
    %187 = arith.divf %185, %186 : vector<4x64xf32>
    %188 = arith.mulf %182, %187 : vector<4x64xf32>
    %189 = vector.extract_strided_slice %188 {offsets = [0, 0], sizes = [4, 32], strides = [1, 1]} : vector<4x64xf32> to vector<4x32xf32>
    %190 = vector.extract_strided_slice %188 {offsets = [0, 32], sizes = [4, 32], strides = [1, 1]} : vector<4x64xf32> to vector<4x32xf32>
    %191 = arith.maximumf %189, %190 : vector<4x32xf32>
    %192 = vector.extract_strided_slice %191 {offsets = [0, 0], sizes = [1, 32], strides = [1, 1]} : vector<4x32xf32> to vector<1x32xf32>
    %193 = vector.extract_strided_slice %191 {offsets = [1, 0], sizes = [1, 32], strides = [1, 1]} : vector<4x32xf32> to vector<1x32xf32>
    %194 = arith.maximumf %192, %193 : vector<1x32xf32>
    %c0_110 = arith.constant 0 : index
    %c0_111 = arith.constant 0 : index
    %195 = vector.load %arg9[%c0_110, %c0_111] : memref<64x32xf32, #tpu.memory_space<vmem>>, vector<32x32xf32>
    %cst_112 = arith.constant dense<0.000000e+00> : vector<1x32xf32>
    %196 = tpu.matmul %194, %195, %cst_112 {dimension_numbers = #tpu.dot_dimension_numbers<[1], [0], [0], [1], [0, 0, 1, 1], [], []>} : vector<1x32xf32>, vector<32x32xf32>, vector<1x32xf32> -> vector<1x32xf32>
    %197 = arith.addf %133, %196 : vector<1x32xf32>
    %198 = vector.extract_strided_slice %191 {offsets = [2, 0], sizes = [1, 32], strides = [1, 1]} : vector<4x32xf32> to vector<1x32xf32>
    %199 = vector.extract_strided_slice %191 {offsets = [3, 0], sizes = [1, 32], strides = [1, 1]} : vector<4x32xf32> to vector<1x32xf32>
    %200 = arith.maximumf %198, %199 : vector<1x32xf32>
    %c32_113 = arith.constant 32 : index
    %c0_114 = arith.constant 0 : index
    %201 = vector.load %arg9[%c32_113, %c0_114] : memref<64x32xf32, #tpu.memory_space<vmem>>, vector<32x32xf32>
    %cst_115 = arith.constant dense<0.000000e+00> : vector<1x32xf32>
    %202 = tpu.matmul %200, %201, %cst_115 {dimension_numbers = #tpu.dot_dimension_numbers<[1], [0], [0], [1], [0, 0, 1, 1], [], []>} : vector<1x32xf32>, vector<32x32xf32>, vector<1x32xf32> -> vector<1x32xf32>
    %203 = arith.addf %197, %202 : vector<1x32xf32>
    %c0_116 = arith.constant 0 : index
    %c0_117 = arith.constant 0 : index
    %204 = vector.load %arg10[%c0_116, %c0_117] : memref<1x32xf32, #tpu.memory_space<vmem>>, vector<1x32xf32>
    %205 = arith.addf %203, %204 : vector<1x32xf32>
    %206 = arith.negf %205 : vector<1x32xf32>
    %207 = math.exp %206 : vector<1x32xf32>
    %cst_118 = arith.constant 1.000000e+00 : f32
    %208 = vector.broadcast %cst_118 : f32 to vector<1x32xf32>
    %209 = arith.addf %208, %207 : vector<1x32xf32>
    %210 = arith.divf %208, %209 : vector<1x32xf32>
    %211 = arith.mulf %205, %210 : vector<1x32xf32>
    %c0_119 = arith.constant 0 : index
    %c0_120 = arith.constant 0 : index
    %212 = vector.load %arg11[%c0_119, %c0_120] : memref<32x16xf32, #tpu.memory_space<vmem>>, vector<32x16xf32>
    %cst_121 = arith.constant dense<0.000000e+00> : vector<1x16xf32>
    %213 = tpu.matmul %211, %212, %cst_121 {dimension_numbers = #tpu.dot_dimension_numbers<[1], [0], [0], [1], [0, 0, 1, 1], [], []>} : vector<1x32xf32>, vector<32x16xf32>, vector<1x16xf32> -> vector<1x16xf32>
    %c0_122 = arith.constant 0 : index
    %c0_123 = arith.constant 0 : index
    %214 = vector.load %arg12[%c0_122, %c0_123] : memref<1x16xf32, #tpu.memory_space<vmem>>, vector<1x16xf32>
    %215 = arith.addf %213, %214 : vector<1x16xf32>
    %216 = arith.negf %215 : vector<1x16xf32>
    %217 = math.exp %216 : vector<1x16xf32>
    %cst_124 = arith.constant 1.000000e+00 : f32
    %218 = vector.broadcast %cst_124 : f32 to vector<1x16xf32>
    %219 = arith.addf %218, %217 : vector<1x16xf32>
    %220 = arith.divf %218, %219 : vector<1x16xf32>
    %221 = arith.mulf %215, %220 : vector<1x16xf32>
    %c0_125 = arith.constant 0 : index
    %c0_126 = arith.constant 0 : index
    %222 = vector.load %arg13[%c0_125, %c0_126] : memref<16x5xf32, #tpu.memory_space<vmem>>, vector<16x5xf32>
    %cst_127 = arith.constant dense<0.000000e+00> : vector<1x5xf32>
    %223 = tpu.matmul %221, %222, %cst_127 {dimension_numbers = #tpu.dot_dimension_numbers<[1], [0], [0], [1], [0, 0, 1, 1], [], []>} : vector<1x16xf32>, vector<16x5xf32>, vector<1x5xf32> -> vector<1x5xf32>
    %c0_128 = arith.constant 0 : index
    %c0_129 = arith.constant 0 : index
    %224 = vector.load %arg14[%c0_128, %c0_129] : memref<1x5xf32, #tpu.memory_space<vmem>>, vector<1x5xf32>
    %225 = arith.addf %223, %224 : vector<1x5xf32>
    %cst_130 = arith.constant dense<0xFF800000> : vector<1xf32>
    %226 = vector.multi_reduction <maximumf>, %225, %cst_130 [1] : vector<1x5xf32> to vector<1xf32>
    %227 = vector.shape_cast %226 : vector<1xf32> to vector<1x1xf32>
    %228 = vector.broadcast %227 : vector<1x1xf32> to vector<1x5xf32>
    %229 = arith.subf %225, %228 : vector<1x5xf32>
    %230 = math.exp %229 : vector<1x5xf32>
    %cst_131 = arith.constant dense<0.000000e+00> : vector<1xf32>
    %231 = vector.multi_reduction <add>, %230, %cst_131 [1] : vector<1x5xf32> to vector<1xf32>
    %232 = vector.shape_cast %231 : vector<1xf32> to vector<1x1xf32>
    %233 = vector.broadcast %232 : vector<1x1xf32> to vector<1x5xf32>
    %234 = arith.divf %230, %233 : vector<1x5xf32>
    %c1_132 = arith.constant 1 : index
    %c0_133 = arith.constant 0 : index
    %235 = vector.load %arg15[%c1_132, %c0_133] : memref<2x5xf32, #tpu.memory_space<vmem>>, vector<1x5xf32>
    tpu.vector_store %arg15[%c1_132, %c0_133], %234 {strides = array<i32>} : memref<2x5xf32, #tpu.memory_space<vmem>>, vector<1x5xf32>,
    %cst_134 = arith.constant dense<0xFF800000> : vector<1xf32>
    %236 = vector.multi_reduction <maximumf>, %234, %cst_134 [1] : vector<1x5xf32> to vector<1xf32>
    %237 = vector.shape_cast %236 : vector<1xf32> to vector<1x1xf32>
    %238 = vector.broadcast %237 : vector<1x1xf32> to vector<1x5xf32>
    %239 = arith.subf %234, %238 : vector<1x5xf32>
    %240 = math.exp %239 : vector<1x5xf32>
    %cst_135 = arith.constant dense<0.000000e+00> : vector<1xf32>
    %241 = vector.multi_reduction <add>, %240, %cst_135 [1] : vector<1x5xf32> to vector<1xf32>
    %242 = vector.shape_cast %241 : vector<1xf32> to vector<1x1xf32>
    %243 = math.log %242 : vector<1x1xf32>
    %244 = arith.addf %243, %237 : vector<1x1xf32>
    %245 = vector.extract_strided_slice %4 {offsets = [1, 0], sizes = [1, 1], strides = [1, 1]} : vector<2x1xi32> to vector<1x1xi32>
    %246 = vector.broadcast %245 : vector<1x1xi32> to vector<1x5xi32>
    %247 = arith.cmpi eq, %5, %246 : vector<1x5xi32>
    %248 = arith.extui %247 : vector<1x5xi1> to vector<1x5xi32>
    %249 = arith.sitofp %248 : vector<1x5xi32> to vector<1x5xf32>
    %250 = arith.mulf %234, %249 : vector<1x5xf32>
    %cst_136 = arith.constant dense<0.000000e+00> : vector<1xf32>
    %251 = vector.multi_reduction <add>, %250, %cst_136 [1] : vector<1x5xf32> to vector<1xf32>
    %252 = vector.shape_cast %251 : vector<1xf32> to vector<1x1xf32>
    %253 = arith.subf %244, %252 : vector<1x1xf32>
    %254 = arith.addf %130, %253 : vector<1x1xf32>
    %cst_137 = arith.constant 5.000000e-01 : f32
    %255 = vector.broadcast %cst_137 : f32 to vector<1x1xf32>
    %256 = arith.mulf %254, %255 : vector<1x1xf32>
    %c0_138 = arith.constant 0 : index
    %c0_139 = arith.constant 0 : index
    %257 = vector.load %arg16[%c0_138, %c0_139] : memref<1x1xf32, #tpu.memory_space<vmem>>, vector<1x1xf32>
    tpu.vector_store %arg16[%c0_138, %c0_139], %256 {strides = array<i32>} : memref<1x1xf32, #tpu.memory_space<vmem>>, vector<1x1xf32>,
    return
  }
}

</mosaic_0001>

<llo_original>
// kernel: cnn_cls_forward.1
$region0: #{cnn_cls_forward.1}
  #allocation0 [shape = 'u32[]', space=smem, size = 0x4, offset = 0x4, fixed_abs, tag = 'smem constant byte address 0x4 - core index']
  #allocation1 [shape = 'u32[144,128]{1,0:T(1,128)}', space=vmem, size = 0x12000, scoped, tag = 'internal scratch']
  #allocation2 [shape = 'f32[20,31]{1,0:T(8,128)}', space=vmem, size = 0x3000, scoped, tag = 'scratch operand']
  #allocation3 [shape = 'f32[10,92]{1,0:T(8,128)}', space=vmem, size = 0x2000, scoped, tag = 'scratch operand']
  %s0 = inlined_call_operand.vmem [shape: f32[16,16], index: 0, kind: input, shape index: {}]
  %s1 = inlined_call_operand.vmem [shape: s32[2,1], index: 1, kind: input, shape index: {}]
  %s2 = inlined_call_operand.vmem [shape: f32[31,64], index: 2, kind: input, shape index: {}]
  %s3 = inlined_call_operand.vmem [shape: f32[31,64], index: 3, kind: input, shape index: {}]
  %s4 = inlined_call_operand.vmem [shape: f32[31,64], index: 4, kind: input, shape index: {}]
  %s5 = inlined_call_operand.vmem [shape: f32[1,64], index: 5, kind: input, shape index: {}]
  %s6 = inlined_call_operand.vmem [shape: f32[92,64], index: 6, kind: input, shape index: {}]
  %s7 = inlined_call_operand.vmem [shape: f32[92,64], index: 7, kind: input, shape index: {}]
  %s8 = inlined_call_operand.vmem [shape: f32[1,64], index: 8, kind: input, shape index: {}]
  %s9 = inlined_call_operand.vmem [shape: f32[64,32], index: 9, kind: input, shape index: {}]
  %s10 = inlined_call_operand.vmem [shape: f32[1,32], index: 10, kind: input, shape index: {}]
  %s11 = inlined_call_operand.vmem [shape: f32[32,16], index: 11, kind: input, shape index: {}]
  %s12 = inlined_call_operand.vmem [shape: f32[1,16], index: 12, kind: input, shape index: {}]
  %s13 = inlined_call_operand.vmem [shape: f32[16,5], index: 13, kind: input, shape index: {}]
  %s14 = inlined_call_operand.vmem [shape: f32[1,5], index: 14, kind: input, shape index: {}]
  %s15 = inlined_call_operand.hbm [shape: f32[2,5], index: 15, kind: output, shape index: {0}]
  %s16 = inlined_call_operand.hbm [shape: f32[1,1], index: 16, kind: output, shape index: {1}]
  %17 = xla_tuple %s15, %s16
  %s18 = sld [smem:[#allocation0]]
  $region78: #{cnn_cls_forward.1} parent=0
    _
  %s20 = ssub.s32 1, %s18
  %s21 = scalar_select 0, %s20, %s18
  $region1: #{cnn_cls_forward.1} parent=0
    #allocation4 [shape = 'u8[1024]{0}', space=vmem, size = 0x400, scoped, tag = 'output window, operand 0, single buffered']
    #allocation5 [shape = 's32[1]{0}', space=sflag, size = 0x4, scoped, tag = 'scoped memory for cnn_cls_forward.1']
    #allocation6 [shape = 'u8[512]{0}', space=vmem, size = 0x400, scoped, tag = 'output window, operand 1, single buffered']
    #allocation7 [shape = 's32[1]{0}', space=sflag, size = 0x4, scoped, tag = 'scoped memory for cnn_cls_forward.1']
    %22 = vsyncpa [#allocation5], 0
    %23 = vsyncpa [#allocation7], 0
    // Predicated region
    $region2: #{cnn_cls_forward.1} parent=1 // pred_check
      _
    $region3: #{cnn_cls_forward.1} parent=1 // pred_check_branch
      %25 = sbr.rel (0) target = $region5
    $region4: #{cnn_cls_forward.1} parent=1 // pred_region
      _
    $region5: #{cnn_cls_forward.1} parent=1 // pred_fallthru
      _
    // Predicated region
    $region6: #{cnn_cls_forward.1} parent=1 // pred_check
      _
    $region7: #{cnn_cls_forward.1} parent=1 // pred_check_branch
      %27 = sbr.rel (0) target = $region9
    $region8: #{cnn_cls_forward.1} parent=1 // pred_region
      _
    $region9: #{cnn_cls_forward.1} parent=1 // pred_fallthru
      _
    // Predicated region
    $region10: #{cnn_cls_forward.1} parent=1 // pred_check
      _
    $region11: #{cnn_cls_forward.1} parent=1 // pred_check_branch
      %29 = sbr.rel (0) target = $region13
    $region12: #{cnn_cls_forward.1} parent=1 // pred_region
      _
    $region13: #{cnn_cls_forward.1} parent=1 // pred_fallthru
      _
    // Predicated region
    $region14: #{cnn_cls_forward.1} parent=1 // pred_check
      _
    $region15: #{cnn_cls_forward.1} parent=1 // pred_check_branch
      %31 = sbr.rel (0) target = $region17
    $region16: #{cnn_cls_forward.1} parent=1 // pred_region
      _
    $region17: #{cnn_cls_forward.1} parent=1 // pred_fallthru
      _
    // Predicated region
    $region18: #{cnn_cls_forward.1} parent=1 // pred_check
      _
    $region19: #{cnn_cls_forward.1} parent=1 // pred_check_branch
      %33 = sbr.rel (0) target = $region21
    $region20: #{cnn_cls_forward.1} parent=1 // pred_region
      _
    $region21: #{cnn_cls_forward.1} parent=1 // pred_fallthru
      _
    // Predicated region
    $region22: #{cnn_cls_forward.1} parent=1 // pred_check
      _
    $region23: #{cnn_cls_forward.1} parent=1 // pred_check_branch
      %35 = sbr.rel (0) target = $region25
    $region24: #{cnn_cls_forward.1} parent=1 // pred_region
      _
    $region25: #{cnn_cls_forward.1} parent=1 // pred_fallthru
      _
    // Predicated region
    $region26: #{cnn_cls_forward.1} parent=1 // pred_check
      _
    $region27: #{cnn_cls_forward.1} parent=1 // pred_check_branch
      %37 = sbr.rel (0) target = $region29
    $region28: #{cnn_cls_forward.1} parent=1 // pred_region
      _
    $region29: #{cnn_cls_forward.1} parent=1 // pred_fallthru
      _
    // Predicated region
    $region30: #{cnn_cls_forward.1} parent=1 // pred_check
      _
    $region31: #{cnn_cls_forward.1} parent=1 // pred_check_branch
      %39 = sbr.rel (0) target = $region33
    $region32: #{cnn_cls_forward.1} parent=1 // pred_region
      _
    $region33: #{cnn_cls_forward.1} parent=1 // pred_fallthru
      _
    // Predicated region
    $region34: #{cnn_cls_forward.1} parent=1 // pred_check
      _
    $region35: #{cnn_cls_forward.1} parent=1 // pred_check_branch
      %41 = sbr.rel (0) target = $region37
    $region36: #{cnn_cls_forward.1} parent=1 // pred_region
      _
    $region37: #{cnn_cls_forward.1} parent=1 // pred_fallthru
      _
    // Predicated region
    $region38: #{cnn_cls_forward.1} parent=1 // pred_check
      _
    $region39: #{cnn_cls_forward.1} parent=1 // pred_check_branch
      %43 = sbr.rel (0) target = $region41
    $region40: #{cnn_cls_forward.1} parent=1 // pred_region
      _
    $region41: #{cnn_cls_forward.1} parent=1 // pred_fallthru
      _
    // Predicated region
    $region42: #{cnn_cls_forward.1} parent=1 // pred_check
      _
    $region43: #{cnn_cls_forward.1} parent=1 // pred_check_branch
      %45 = sbr.rel (0) target = $region45
    $region44: #{cnn_cls_forward.1} parent=1 // pred_region
      _
    $region45: #{cnn_cls_forward.1} parent=1 // pred_fallthru
      _
    // Predicated region
    $region46: #{cnn_cls_forward.1} parent=1 // pred_check
      _
    $region47: #{cnn_cls_forward.1} parent=1 // pred_check_branch
      %47 = sbr.rel (0) target = $region49
    $region48: #{cnn_cls_forward.1} parent=1 // pred_region
      _
    $region49: #{cnn_cls_forward.1} parent=1 // pred_fallthru
      _
    // Predicated region
    $region50: #{cnn_cls_forward.1} parent=1 // pred_check
      _
    $region51: #{cnn_cls_forward.1} parent=1 // pred_check_branch
      %49 = sbr.rel (0) target = $region53
    $region52: #{cnn_cls_forward.1} parent=1 // pred_region
      _
    $region53: #{cnn_cls_forward.1} parent=1 // pred_fallthru
      _
    // Predicated region
    $region54: #{cnn_cls_forward.1} parent=1 // pred_check
      _
    $region55: #{cnn_cls_forward.1} parent=1 // pred_check_branch
      %51 = sbr.rel (0) target = $region57
    $region56: #{cnn_cls_forward.1} parent=1 // pred_region
      _
    $region57: #{cnn_cls_forward.1} parent=1 // pred_fallthru
      _
    // Predicated region
    $region58: #{cnn_cls_forward.1} parent=1 // pred_check
      _
    $region59: #{cnn_cls_forward.1} parent=1 // pred_check_branch
      %53 = sbr.rel (0) target = $region61
    $region60: #{cnn_cls_forward.1} parent=1 // pred_region
      _
    $region61: #{cnn_cls_forward.1} parent=1 // pred_fallthru
      _
    %vm54 = vcmask 252928
    %55 = vst.msk [vmem:[#allocation2] sm:$0xff] %vm54, 0.0
    %56 = vst.msk [vmem:[#allocation2 + $0x8] sm:$0xff] %vm54, 0.0
    %vm57 = vcmask 248832
    %58 = vst.msk [vmem:[#allocation2 + $0x10] sm:$0xf] %vm57, 0.0
    %vm59 = vcmask 752640
    %60 = vst.msk [vmem:[#allocation3] sm:$0xff] %vm59, 0.0
    %vm61 = vcmask 746496
    %62 = vst.msk [vmem:[#allocation3 + $0x8] sm:$0x3] %vm61, 0.0
    %v63 = vld [vmem:[%s1] sm:$0x3]
    %v64 = vlaneseq
    %v65 = vand.u32 %v64, 127
    %v66 = vld [vmem:[%s0] sm:$0xff]
    %68 = vrot.lane.b32.xlu0 %v66, 7
    %v69 = vpop.permute.xlu0 %68
    %vm71 = vcmask 187448
    %72 = vst.msk [vmem:[#allocation2 + $0x1] sm:$0xff] %vm71, %v69
    %v73 = vld [vmem:[#allocation2] sm:$0xff]
    %v74 = vld [vmem:[%s2] sm:$0xff]
    %v75 = vld [vmem:[%s2 + $0x8] sm:$0xff]
    %v76 = vld [vmem:[%s2 + $0x10] sm:$0xff]
    %v77 = vld [vmem:[%s2 + $0x18] sm:$0x7f]
    %v78 = vld [vmem:[#allocation2 + $0x1] sm:$0xff]
    %v79 = vld [vmem:[%s3] sm:$0xff]
    %v80 = vld [vmem:[%s3 + $0x8] sm:$0xff]
    %v81 = vld [vmem:[%s3 + $0x10] sm:$0xff]
    %v82 = vld [vmem:[%s3 + $0x18] sm:$0x7f]
    %v84 = vsel %vm54, %v78, 0
    %vm86 = vcmask 1046528
    %v88 = vsel %vm86, %v82, 0
    %90 = vmatprep.subr.mxu0 0.0
    %91 = vmatpush1.msra.mxu0 %v79
    %92 = vmatprep.subr.mxu0 0.0
    %93 = vmatpush1.msra.mxu0 %v80
    %94 = vmatprep.subr.mxu0 0.0
    %95 = vmatpush1.msra.mxu0 %v81
    %96 = vmatprep.subr.mxu0 0.0
    %97 = vmatpush1.msra.mxu0 %v88
    %98 = vmatprep.subr.mxu0 0.0
    %99 = vmatpush1.msra.mxu0 0.0
    %100 = vmatprep.subr.mxu0 0.0
    %101 = vmatpush1.msra.mxu0 0.0
    %102 = vmatprep.subr.mxu0 0.0
    %103 = vmatpush1.msra.mxu0 0.0
    %104 = vmatprep.subr.mxu0 0.0
    %105 = vmatpush1.msra.mxu0 0.0
    %106 = vmatprep.subr.mxu0 0.0
    %107 = vmatpush1.msra.mxu0 0.0
    %108 = vmatprep.subr.mxu0 0.0
    %109 = vmatpush1.msra.mxu0 0.0
    %110 = vmatprep.subr.mxu0 0.0
    %111 = vmatpush1.msra.mxu0 0.0
    %112 = vmatprep.subr.mxu0 0.0
    %113 = vmatpush1.msra.mxu0 0.0
    %114 = vmatprep.subr.mxu0 0.0
    %115 = vmatpush1.msra.mxu0 0.0
    %116 = vmatprep.subr.mxu0 0.0
    %117 = vmatpush1.msra.mxu0 0.0
    %118 = vmatprep.subr.mxu0 0.0
    %119 = vmatpush1.msra.mxu0 0.0
    %120 = vmatprep.subr.mxu0 0.0
    %121 = vmatpush1.msra.mxu0 0.0
    %122 = vmatprep.subr.mxu0 0.0
    %123 = vmatpush1.msra.mxu0 0.0
    %124 = vmatprep.subr.mxu0 0.0
    %125 = vmatpush1.msra.mxu0 0.0
    %126 = vmatprep.subr.mxu0 0.0
    %127 = vmatpush1.msra.mxu0 0.0
    %128 = vmatprep.subr.mxu0 0.0
    %129 = vmatpush1.msra.mxu0 0.0
    %130 = vmatprep.subr.mxu0 0.0
    %131 = vmatpush1.msra.mxu0 0.0
    %132 = vmatprep.subr.mxu0 0.0
    %133 = vmatpush1.msra.mxu0 0.0
    %134 = vmatprep.subr.mxu0 0.0
    %135 = vmatpush1.msra.mxu0 0.0
    %136 = vmatprep.subr.mxu0 0.0
    %137 = vmatpush1.msra.mxu0 0.0
    %138 = vmatprep.subr.mxu0 0.0
    %139 = vmatpush1.msra.mxu0 0.0
    %140 = vmatprep.subr.mxu0 0.0
    %141 = vmatpush1.msra.mxu0 0.0
    %142 = vmatprep.subr.mxu0 0.0
    %143 = vmatpush1.msra.mxu0 0.0
    %144 = vmatprep.subr.mxu0 0.0
    %145 = vmatpush1.msra.mxu0 0.0
    %146 = vmatprep.subr.mxu0 0.0
    %147 = vmatpush1.msra.mxu0 0.0
    %148 = vmatprep.subr.mxu0 0.0
    %149 = vmatpush1.msra.mxu0 0.0
    %150 = vmatprep.subr.mxu0 0.0
    %151 = vmatpush1.msra.mxu0 0.0
    %152 = vmatprep.subr.mxu0 0.0
    %153 = vmatpush1.msra.mxu0 0.0
    %154 = vmatprep.mubr.f32.mxu0 0.0
    %155 = vmatmul.mubr.f32.gmra.mrb[0].mxu0 %v84
    %v156 = vpop.f32.mrb[0].mxu0
    %v157 = vadd.f32 0.0, %v156
    %v158 = vpop.f32.mrb[0].mxu0
    %159 = vdwg.mxu0
    %v161 = vsel %vm54, %v73, 0
    %v164 = vsel %vm86, %v77, 0
    %166 = vmatprep.subr.mxu0 0.0
    %167 = vmatpush1.msra.mxu0 %v74
    %168 = vmatprep.subr.mxu0 0.0
    %169 = vmatpush1.msra.mxu0 %v75
    %170 = vmatprep.subr.mxu0 0.0
    %171 = vmatpush1.msra.mxu0 %v76
    %172 = vmatprep.subr.mxu0 0.0
    %173 = vmatpush1.msra.mxu0 %v164
    %174 = vmatprep.subr.mxu0 0.0
    %175 = vmatpush1.msra.mxu0 0.0
    %176 = vmatprep.subr.mxu0 0.0
    %177 = vmatpush1.msra.mxu0 0.0
    %178 = vmatprep.subr.mxu0 0.0
    %179 = vmatpush1.msra.mxu0 0.0
    %180 = vmatprep.subr.mxu0 0.0
    %181 = vmatpush1.msra.mxu0 0.0
    %182 = vmatprep.subr.mxu0 0.0
    %183 = vmatpush1.msra.mxu0 0.0
    %184 = vmatprep.subr.mxu0 0.0
    %185 = vmatpush1.msra.mxu0 0.0
    %186 = vmatprep.subr.mxu0 0.0
    %187 = vmatpush1.msra.mxu0 0.0
    %188 = vmatprep.subr.mxu0 0.0
    %189 = vmatpush1.msra.mxu0 0.0
    %190 = vmatprep.subr.mxu0 0.0
    %191 = vmatpush1.msra.mxu0 0.0
    %192 = vmatprep.subr.mxu0 0.0
    %193 = vmatpush1.msra.mxu0 0.0
    %194 = vmatprep.subr.mxu0 0.0
    %195 = vmatpush1.msra.mxu0 0.0
    %196 = vmatprep.subr.mxu0 0.0
    %197 = vmatpush1.msra.mxu0 0.0
    %198 = vmatprep.subr.mxu0 0.0
    %199 = vmatpush1.msra.mxu0 0.0
    %200 = vmatprep.subr.mxu0 0.0
    %201 = vmatpush1.msra.mxu0 0.0
    %202 = vmatprep.subr.mxu0 0.0
    %203 = vmatpush1.msra.mxu0 0.0
    %204 = vmatprep.subr.mxu0 0.0
    %205 = vmatpush1.msra.mxu0 0.0
    %206 = vmatprep.subr.mxu0 0.0
    %207 = vmatpush1.msra.mxu0 0.0
    %208 = vmatprep.subr.mxu0 0.0
    %209 = vmatpush1.msra.mxu0 0.0
    %210 = vmatprep.subr.mxu0 0.0
    %211 = vmatpush1.msra.mxu0 0.0
    %212 = vmatprep.subr.mxu0 0.0
    %213 = vmatpush1.msra.mxu0 0.0
    %214 = vmatprep.subr.mxu0 0.0
    %215 = vmatpush1.msra.mxu0 0.0
    %216 = vmatprep.subr.mxu0 0.0
    %217 = vmatpush1.msra.mxu0 0.0
    %218 = vmatprep.subr.mxu0 0.0
    %219 = vmatpush1.msra.mxu0 0.0
    %220 = vmatprep.subr.mxu0 0.0
    %221 = vmatpush1.msra.mxu0 0.0
    %222 = vmatprep.subr.mxu0 0.0
    %223 = vmatpush1.msra.mxu0 0.0
    %224 = vmatprep.subr.mxu0 0.0
    %225 = vmatpush1.msra.mxu0 0.0
    %226 = vmatprep.subr.mxu0 0.0
    %227 = vmatpush1.msra.mxu0 0.0
    %228 = vmatprep.subr.mxu0 0.0
    %229 = vmatpush1.msra.mxu0 0.0
    %230 = vmatprep.mubr.f32.mxu0 0.0
    %231 = vmatmul.mubr.f32.gmra.mrb[0].mxu0 %v161
    %v232 = vpop.f32.mrb[0].mxu0
    %v233 = vadd.f32 %v157, %v232
    %v234 = vpop.f32.mrb[0].mxu0
    %235 = vdwg.mxu0
    %v236 = vld [vmem:[#allocation2 + $0x2] sm:$0xff]
    %v237 = vld [vmem:[%s4] sm:$0xff]
    %v238 = vld [vmem:[%s4 + $0x8] sm:$0xff]
    %v239 = vld [vmem:[%s4 + $0x10] sm:$0xff]
    %v240 = vld [vmem:[%s4 + $0x18] sm:$0x7f]
    %v242 = vsel %vm54, %v236, 0
    %v245 = vsel %vm86, %v240, 0
    %247 = vmatprep.subr.mxu0 0.0
    %248 = vmatpush1.msra.mxu0 %v237
    %249 = vmatprep.subr.mxu0 0.0
    %250 = vmatpush1.msra.mxu0 %v238
    %251 = vmatprep.subr.mxu0 0.0
    %252 = vmatpush1.msra.mxu0 %v239
    %253 = vmatprep.subr.mxu0 0.0
    %254 = vmatpush1.msra.mxu0 %v245
    %255 = vmatprep.subr.mxu0 0.0
    %256 = vmatpush1.msra.mxu0 0.0
    %257 = vmatprep.subr.mxu0 0.0
    %258 = vmatpush1.msra.mxu0 0.0
    %259 = vmatprep.subr.mxu0 0.0
    %260 = vmatpush1.msra.mxu0 0.0
    %261 = vmatprep.subr.mxu0 0.0
    %262 = vmatpush1.msra.mxu0 0.0
    %263 = vmatprep.subr.mxu0 0.0
    %264 = vmatpush1.msra.mxu0 0.0
    %265 = vmatprep.subr.mxu0 0.0
    %266 = vmatpush1.msra.mxu0 0.0
    %267 = vmatprep.subr.mxu0 0.0
    %268 = vmatpush1.msra.mxu0 0.0
    %269 = vmatprep.subr.mxu0 0.0
    %270 = vmatpush1.msra.mxu0 0.0
    %271 = vmatprep.subr.mxu0 0.0
    %272 = vmatpush1.msra.mxu0 0.0
    %273 = vmatprep.subr.mxu0 0.0
    %274 = vmatpush1.msra.mxu0 0.0
    %275 = vmatprep.subr.mxu0 0.0
    %276 = vmatpush1.msra.mxu0 0.0
    %277 = vmatprep.subr.mxu0 0.0
    %278 = vmatpush1.msra.mxu0 0.0
    %279 = vmatprep.subr.mxu0 0.0
    %280 = vmatpush1.msra.mxu0 0.0
    %281 = vmatprep.subr.mxu0 0.0
    %282 = vmatpush1.msra.mxu0 0.0
    %283 = vmatprep.subr.mxu0 0.0
    %284 = vmatpush1.msra.mxu0 0.0
    %285 = vmatprep.subr.mxu0 0.0
    %286 = vmatpush1.msra.mxu0 0.0
    %287 = vmatprep.subr.mxu0 0.0
    %288 = vmatpush1.msra.mxu0 0.0
    %289 = vmatprep.subr.mxu0 0.0
    %290 = vmatpush1.msra.mxu0 0.0
    %291 = vmatprep.subr.mxu0 0.0
    %292 = vmatpush1.msra.mxu0 0.0
    %293 = vmatprep.subr.mxu0 0.0
    %294 = vmatpush1.msra.mxu0 0.0
    %295 = vmatprep.subr.mxu0 0.0
    %296 = vmatpush1.msra.mxu0 0.0
    %297 = vmatprep.subr.mxu0 0.0
    %298 = vmatpush1.msra.mxu0 0.0
    %299 = vmatprep.subr.mxu0 0.0
    %300 = vmatpush1.msra.mxu0 0.0
    %301 = vmatprep.subr.mxu0 0.0
    %302 = vmatpush1.msra.mxu0 0.0
    %303 = vmatprep.subr.mxu0 0.0
    %304 = vmatpush1.msra.mxu0 0.0
    %305 = vmatprep.subr.mxu0 0.0
    %306 = vmatpush1.msra.mxu0 0.0
    %307 = vmatprep.subr.mxu0 0.0
    %308 = vmatpush1.msra.mxu0 0.0
    %309 = vmatprep.subr.mxu0 0.0
    %310 = vmatpush1.msra.mxu0 0.0
    %311 = vmatprep.mubr.f32.mxu0 0.0
    %312 = vmatmul.mubr.f32.gmra.mrb[0].mxu0 %v242
    %v313 = vpop.f32.mrb[0].mxu0
    %v314 = vadd.f32 0.0, %v313
    %v315 = vpop.f32.mrb[0].mxu0
    %316 = vdwg.mxu0
    %v317 = vadd.f32 %v233, %v314
    %v318 = vld [vmem:[%s5] sm:$0x1]
    %v320 = vlaneseq
    %v321 = vshrl.u32 %v320, 7
    %v322 = vsub.s32 0, %v321
    %v323 = vrot.slane %v318, %v322
    %v325 = vadd.f32 %v317, %v323
    %v326 = vxor.u32 %v325, 2147483648
    %v327 = vmul.f32 %v326, 1.442695
    %v328 = vpow.pop %v327
    %v329 = vadd.f32 %v328, 1.0
    %v330 = vrcp.pop %v329
    %v331 = vmul.f32 1.0, %v330
    %v332 = vmul.f32 %v325, %v331
    %334 = vrot.lane.b32.xlu0 %v332, 96
    %v335 = vpop.permute.xlu0 %334
    %v337 = vmax.f32 %v332, %v335
    %v339 = vrot.slane %v337, 1
    %v341 = vmax.f32 %v337, %v339
    %343 = vrot.lane.b32.xlu0 %v341, 28
    %v344 = vpop.permute.xlu0 %343
    %vm346 = vcmask 483552
    %347 = vst.msk [vmem:[#allocation3] sm:$0x1] %vm346, %v344
    %vm348 = vcmask 485602
    %349 = vst.msk [vmem:[#allocation3 - $0x1] sm:$0x4] %vm348, %v344
    %vm350 = vcmask 487652
    %351 = vst.msk [vmem:[#allocation3 - $0x2] sm:$0x10] %vm350, %v344
    %vm352 = vcmask 489702
    %353 = vst.msk [vmem:[#allocation3 - $0x3] sm:$0x40] %vm352, %v344
    %v354 = vld [vmem:[#allocation3] sm:$0xf]
    %v355 = vld [vmem:[%s6] sm:$0xff]
    %v356 = vld [vmem:[%s6 + $0x8] sm:$0xff]
    %v357 = vld [vmem:[%s6 + $0x10] sm:$0xff]
    %v358 = vld [vmem:[%s6 + $0x18] sm:$0xff]
    %v359 = vld [vmem:[%s6 + $0x20] sm:$0xff]
    %v360 = vld [vmem:[%s6 + $0x28] sm:$0xff]
    %v361 = vld [vmem:[%s6 + $0x30] sm:$0xff]
    %v362 = vld [vmem:[%s6 + $0x38] sm:$0xff]
    %v363 = vld [vmem:[%s6 + $0x40] sm:$0xff]
    %v364 = vld [vmem:[%s6 + $0x48] sm:$0xff]
    %v365 = vld [vmem:[%s6 + $0x50] sm:$0xff]
    %v366 = vld [vmem:[%s6 + $0x58] sm:$0xf]
    %v367 = vld [vmem:[#allocation3 + $0x1] sm:$0xf]
    %v368 = vld [vmem:[%s7] sm:$0xff]
    %v369 = vld [vmem:[%s7 + $0x8] sm:$0xff]
    %v370 = vld [vmem:[%s7 + $0x10] sm:$0xff]
    %v371 = vld [vmem:[%s7 + $0x18] sm:$0xff]
    %v372 = vld [vmem:[%s7 + $0x20] sm:$0xff]
    %v373 = vld [vmem:[%s7 + $0x28] sm:$0xff]
    %v374 = vld [vmem:[%s7 + $0x30] sm:$0xff]
    %v375 = vld [vmem:[%s7 + $0x38] sm:$0xff]
    %v376 = vld [vmem:[%s7 + $0x40] sm:$0xff]
    %v377 = vld [vmem:[%s7 + $0x48] sm:$0xff]
    %v378 = vld [vmem:[%s7 + $0x50] sm:$0xff]
    %v379 = vld [vmem:[%s7 + $0x58] sm:$0xf]
    %v381 = vsel %vm59, %v367, 0
    %vm383 = vcmask 1043456
    %v385 = vsel %vm383, %v379, 0
    %387 = vmatprep.subr.mxu0 0.0
    %388 = vmatpush1.msra.mxu0 %v368
    %389 = vmatprep.subr.mxu0 0.0
    %390 = vmatpush1.msra.mxu0 %v369
    %391 = vmatprep.subr.mxu0 0.0
    %392 = vmatpush1.msra.mxu0 %v370
    %393 = vmatprep.subr.mxu0 0.0
    %394 = vmatpush1.msra.mxu0 %v371
    %395 = vmatprep.subr.mxu0 0.0
    %396 = vmatpush1.msra.mxu0 %v372
    %397 = vmatprep.subr.mxu0 0.0
    %398 = vmatpush1.msra.mxu0 %v373
    %399 = vmatprep.subr.mxu0 0.0
    %400 = vmatpush1.msra.mxu0 %v374
    %401 = vmatprep.subr.mxu0 0.0
    %402 = vmatpush1.msra.mxu0 %v375
    %403 = vmatprep.subr.mxu0 0.0
    %404 = vmatpush1.msra.mxu0 %v376
    %405 = vmatprep.subr.mxu0 0.0
    %406 = vmatpush1.msra.mxu0 %v377
    %407 = vmatprep.subr.mxu0 0.0
    %408 = vmatpush1.msra.mxu0 %v378
    %409 = vmatprep.subr.mxu0 0.0
    %410 = vmatpush1.msra.mxu0 %v385
    %411 = vmatprep.subr.mxu0 0.0
    %412 = vmatpush1.msra.mxu0 0.0
    %413 = vmatprep.subr.mxu0 0.0
    %414 = vmatpush1.msra.mxu0 0.0
    %415 = vmatprep.subr.mxu0 0.0
    %416 = vmatpush1.msra.mxu0 0.0
    %417 = vmatprep.subr.mxu0 0.0
    %418 = vmatpush1.msra.mxu0 0.0
    %419 = vmatprep.subr.mxu0 0.0
    %420 = vmatpush1.msra.mxu0 0.0
    %421 = vmatprep.subr.mxu0 0.0
    %422 = vmatpush1.msra.mxu0 0.0
    %423 = vmatprep.subr.mxu0 0.0
    %424 = vmatpush1.msra.mxu0 0.0
    %425 = vmatprep.subr.mxu0 0.0
    %426 = vmatpush1.msra.mxu0 0.0
    %427 = vmatprep.subr.mxu0 0.0
    %428 = vmatpush1.msra.mxu0 0.0
    %429 = vmatprep.subr.mxu0 0.0
    %430 = vmatpush1.msra.mxu0 0.0
    %431 = vmatprep.subr.mxu0 0.0
    %432 = vmatpush1.msra.mxu0 0.0
    %433 = vmatprep.subr.mxu0 0.0
    %434 = vmatpush1.msra.mxu0 0.0
    %435 = vmatprep.subr.mxu0 0.0
    %436 = vmatpush1.msra.mxu0 0.0
    %437 = vmatprep.subr.mxu0 0.0
    %438 = vmatpush1.msra.mxu0 0.0
    %439 = vmatprep.subr.mxu0 0.0
    %440 = vmatpush1.msra.mxu0 0.0
    %441 = vmatprep.subr.mxu0 0.0
    %442 = vmatpush1.msra.mxu0 0.0
    %443 = vmatprep.subr.mxu0 0.0
    %444 = vmatpush1.msra.mxu0 0.0
    %445 = vmatprep.subr.mxu0 0.0
    %446 = vmatpush1.msra.mxu0 0.0
    %447 = vmatprep.subr.mxu0 0.0
    %448 = vmatpush1.msra.mxu0 0.0
    %449 = vmatprep.subr.mxu0 0.0
    %450 = vmatpush1.msra.mxu0 0.0
    %451 = vmatprep.mubr.f32.mxu0 0.0
    %452 = vmatmul.mubr.f32.gmra.mrb[0].mxu0 %v381
    %v453 = vpop.f32.mrb[0].mxu0
    %v454 = vadd.f32 0.0, %v453
    %v455 = vpop.f32.mrb[0].mxu0
    %456 = vdwg.mxu0
    %v458 = vsel %vm59, %v354, 0
    %v461 = vsel %vm383, %v366, 0
    %463 = vmatprep.subr.mxu0 0.0
    %464 = vmatpush1.msra.mxu0 %v355
    %465 = vmatprep.subr.mxu0 0.0
    %466 = vmatpush1.msra.mxu0 %v356
    %467 = vmatprep.subr.mxu0 0.0
    %468 = vmatpush1.msra.mxu0 %v357
    %469 = vmatprep.subr.mxu0 0.0
    %470 = vmatpush1.msra.mxu0 %v358
    %471 = vmatprep.subr.mxu0 0.0
    %472 = vmatpush1.msra.mxu0 %v359
    %473 = vmatprep.subr.mxu0 0.0
    %474 = vmatpush1.msra.mxu0 %v360
    %475 = vmatprep.subr.mxu0 0.0
    %476 = vmatpush1.msra.mxu0 %v361
    %477 = vmatprep.subr.mxu0 0.0
    %478 = vmatpush1.msra.mxu0 %v362
    %479 = vmatprep.subr.mxu0 0.0
    %480 = vmatpush1.msra.mxu0 %v363
    %481 = vmatprep.subr.mxu0 0.0
    %482 = vmatpush1.msra.mxu0 %v364
    %483 = vmatprep.subr.mxu0 0.0
    %484 = vmatpush1.msra.mxu0 %v365
    %485 = vmatprep.subr.mxu0 0.0
    %486 = vmatpush1.msra.mxu0 %v461
    %487 = vmatprep.subr.mxu0 0.0
    %488 = vmatpush1.msra.mxu0 0.0
    %489 = vmatprep.subr.mxu0 0.0
    %490 = vmatpush1.msra.mxu0 0.0
    %491 = vmatprep.subr.mxu0 0.0
    %492 = vmatpush1.msra.mxu0 0.0
    %493 = vmatprep.subr.mxu0 0.0
    %494 = vmatpush1.msra.mxu0 0.0
    %495 = vmatprep.subr.mxu0 0.0
    %496 = vmatpush1.msra.mxu0 0.0
    %497 = vmatprep.subr.mxu0 0.0
    %498 = vmatpush1.msra.mxu0 0.0
    %499 = vmatprep.subr.mxu0 0.0
    %500 = vmatpush1.msra.mxu0 0.0
    %501 = vmatprep.subr.mxu0 0.0
    %502 = vmatpush1.msra.mxu0 0.0
    %503 = vmatprep.subr.mxu0 0.0
    %504 = vmatpush1.msra.mxu0 0.0
    %505 = vmatprep.subr.mxu0 0.0
    %506 = vmatpush1.msra.mxu0 0.0
    %507 = vmatprep.subr.mxu0 0.0
    %508 = vmatpush1.msra.mxu0 0.0
    %509 = vmatprep.subr.mxu0 0.0
    %510 = vmatpush1.msra.mxu0 0.0
    %511 = vmatprep.subr.mxu0 0.0
    %512 = vmatpush1.msra.mxu0 0.0
    %513 = vmatprep.subr.mxu0 0.0
    %514 = vmatpush1.msra.mxu0 0.0
    %515 = vmatprep.subr.mxu0 0.0
    %516 = vmatpush1.msra.mxu0 0.0
    %517 = vmatprep.subr.mxu0 0.0
    %518 = vmatpush1.msra.mxu0 0.0
    %519 = vmatprep.subr.mxu0 0.0
    %520 = vmatpush1.msra.mxu0 0.0
    %521 = vmatprep.subr.mxu0 0.0
    %522 = vmatpush1.msra.mxu0 0.0
    %523 = vmatprep.subr.mxu0 0.0
    %524 = vmatpush1.msra.mxu0 0.0
    %525 = vmatprep.subr.mxu0 0.0
    %526 = vmatpush1.msra.mxu0 0.0
    %527 = vmatprep.mubr.f32.mxu0 0.0
    %528 = vmatmul.mubr.f32.gmra.mrb[0].mxu0 %v458
    %v529 = vpop.f32.mrb[0].mxu0
    %v530 = vadd.f32 %v454, %v529
    %v531 = vpop.f32.mrb[0].mxu0
    %532 = vdwg.mxu0
    %v533 = vld [vmem:[%s8] sm:$0x1]
    %v535 = vlaneseq
    %v536 = vshrl.u32 %v535, 7
    %v537 = vsub.s32 0, %v536
    %v538 = vrot.slane %v533, %v537
    %v540 = vadd.f32 %v530, %v538
    %v541 = vxor.u32 %v540, 2147483648
    %v542 = vmul.f32 %v541, 1.442695
    %v543 = vpow.pop %v542
    %v544 = vadd.f32 %v543, 1.0
    %v545 = vrcp.pop %v544
    %v546 = vmul.f32 1.0, %v545
    %v547 = vmul.f32 %v540, %v546
    %549 = vrot.lane.b32.xlu0 %v547, 96
    %v550 = vpop.permute.xlu0 %549
    %v552 = vmax.f32 %v547, %v550
    %v554 = vrot.slane %v552, 1
    %v556 = vmax.f32 %v552, %v554
    %v557 = vld [vmem:[%s9] sm:$0xff]
    %v558 = vld [vmem:[%s9 + $0x8] sm:$0xff]
    %v559 = vld [vmem:[%s9 + $0x10] sm:$0xff]
    %v560 = vld [vmem:[%s9 + $0x18] sm:$0xff]
    %v561 = vld [vmem:[%s9 + $0x20] sm:$0xff]
    %v562 = vld [vmem:[%s9 + $0x28] sm:$0xff]
    %v563 = vld [vmem:[%s9 + $0x30] sm:$0xff]
    %v564 = vld [vmem:[%s9 + $0x38] sm:$0xff]
    %v566 = vrot.slane %v556, 2
    %vm567 = vcmask 261120
    %v568 = vsel %vm567, %v566, 0
    %570 = vmatprep.subr.mxu0 0.0
    %571 = vmatpush1.msra.mxu0 %v561
    %572 = vmatprep.subr.mxu0 0.0
    %573 = vmatpush1.msra.mxu0 %v562
    %574 = vmatprep.subr.mxu0 0.0
    %575 = vmatpush1.msra.mxu0 %v563
    %576 = vmatprep.subr.mxu0 0.0
    %577 = vmatpush1.msra.mxu0 %v564
    %578 = vmatprep.subr.mxu0 0.0
    %579 = vmatpush1.msra.mxu0 0.0
    %580 = vmatprep.subr.mxu0 0.0
    %581 = vmatpush1.msra.mxu0 0.0
    %582 = vmatprep.subr.mxu0 0.0
    %583 = vmatpush1.msra.mxu0 0.0
    %584 = vmatprep.subr.mxu0 0.0
    %585 = vmatpush1.msra.mxu0 0.0
    %586 = vmatprep.subr.mxu0 0.0
    %587 = vmatpush1.msra.mxu0 0.0
    %588 = vmatprep.subr.mxu0 0.0
    %589 = vmatpush1.msra.mxu0 0.0
    %590 = vmatprep.subr.mxu0 0.0
    %591 = vmatpush1.msra.mxu0 0.0
    %592 = vmatprep.subr.mxu0 0.0
    %593 = vmatpush1.msra.mxu0 0.0
    %594 = vmatprep.subr.mxu0 0.0
    %595 = vmatpush1.msra.mxu0 0.0
    %596 = vmatprep.subr.mxu0 0.0
    %597 = vmatpush1.msra.mxu0 0.0
    %598 = vmatprep.subr.mxu0 0.0
    %599 = vmatpush1.msra.mxu0 0.0
    %600 = vmatprep.subr.mxu0 0.0
    %601 = vmatpush1.msra.mxu0 0.0
    %602 = vmatprep.subr.mxu0 0.0
    %603 = vmatpush1.msra.mxu0 0.0
    %604 = vmatprep.subr.mxu0 0.0
    %605 = vmatpush1.msra.mxu0 0.0
    %606 = vmatprep.subr.mxu0 0.0
    %607 = vmatpush1.msra.mxu0 0.0
    %608 = vmatprep.subr.mxu0 0.0
    %609 = vmatpush1.msra.mxu0 0.0
    %610 = vmatprep.subr.mxu0 0.0
    %611 = vmatpush1.msra.mxu0 0.0
    %612 = vmatprep.subr.mxu0 0.0
    %613 = vmatpush1.msra.mxu0 0.0
    %614 = vmatprep.subr.mxu0 0.0
    %615 = vmatpush1.msra.mxu0 0.0
    %616 = vmatprep.subr.mxu0 0.0
    %617 = vmatpush1.msra.mxu0 0.0
    %618 = vmatprep.subr.mxu0 0.0
    %619 = vmatpush1.msra.mxu0 0.0
    %620 = vmatprep.subr.mxu0 0.0
    %621 = vmatpush1.msra.mxu0 0.0
    %622 = vmatprep.subr.mxu0 0.0
    %623 = vmatpush1.msra.mxu0 0.0
    %624 = vmatprep.subr.mxu0 0.0
    %625 = vmatpush1.msra.mxu0 0.0
    %626 = vmatprep.subr.mxu0 0.0
    %627 = vmatpush1.msra.mxu0 0.0
    %628 = vmatprep.subr.mxu0 0.0
    %629 = vmatpush1.msra.mxu0 0.0
    %630 = vmatprep.subr.mxu0 0.0
    %631 = vmatpush1.msra.mxu0 0.0
    %632 = vmatprep.subr.mxu0 0.0
    %633 = vmatpush1.msra.mxu0 0.0
    %634 = vmatprep.mubr.f32.mxu0 0.0
    %635 = vmatmul.mubr.f32.gmra.mrb[0].mxu0 %v568
    %v636 = vpop.f32.mrb[0].mxu0
    %v637 = vadd.f32 0.0, %v636
    %v638 = vpop.f32.mrb[0].mxu0
    %639 = vdwg.mxu0
    %v640 = vsel %vm567, %v556, 0
    %642 = vmatprep.subr.mxu0 0.0
    %643 = vmatpush1.msra.mxu0 %v557
    %644 = vmatprep.subr.mxu0 0.0
    %645 = vmatpush1.msra.mxu0 %v558
    %646 = vmatprep.subr.mxu0 0.0
    %647 = vmatpush1.msra.mxu0 %v559
    %648 = vmatprep.subr.mxu0 0.0
    %649 = vmatpush1.msra.mxu0 %v560
    %650 = vmatprep.subr.mxu0 0.0
    %651 = vmatpush1.msra.mxu0 0.0
    %652 = vmatprep.subr.mxu0 0.0
    %653 = vmatpush1.msra.mxu0 0.0
    %654 = vmatprep.subr.mxu0 0.0
    %655 = vmatpush1.msra.mxu0 0.0
    %656 = vmatprep.subr.mxu0 0.0
    %657 = vmatpush1.msra.mxu0 0.0
    %658 = vmatprep.subr.mxu0 0.0
    %659 = vmatpush1.msra.mxu0 0.0
    %660 = vmatprep.subr.mxu0 0.0
    %661 = vmatpush1.msra.mxu0 0.0
    %662 = vmatprep.subr.mxu0 0.0
    %663 = vmatpush1.msra.mxu0 0.0
    %664 = vmatprep.subr.mxu0 0.0
    %665 = vmatpush1.msra.mxu0 0.0
    %666 = vmatprep.subr.mxu0 0.0
    %667 = vmatpush1.msra.mxu0 0.0
    %668 = vmatprep.subr.mxu0 0.0
    %669 = vmatpush1.msra.mxu0 0.0
    %670 = vmatprep.subr.mxu0 0.0
    %671 = vmatpush1.msra.mxu0 0.0
    %672 = vmatprep.subr.mxu0 0.0
    %673 = vmatpush1.msra.mxu0 0.0
    %674 = vmatprep.subr.mxu0 0.0
    %675 = vmatpush1.msra.mxu0 0.0
    %676 = vmatprep.subr.mxu0 0.0
    %677 = vmatpush1.msra.mxu0 0.0
    %678 = vmatprep.subr.mxu0 0.0
    %679 = vmatpush1.msra.mxu0 0.0
    %680 = vmatprep.subr.mxu0 0.0
    %681 = vmatpush1.msra.mxu0 0.0
    %682 = vmatprep.subr.mxu0 0.0
    %683 = vmatpush1.msra.mxu0 0.0
    %684 = vmatprep.subr.mxu0 0.0
    %685 = vmatpush1.msra.mxu0 0.0
    %686 = vmatprep.subr.mxu0 0.0
    %687 = vmatpush1.msra.mxu0 0.0
    %688 = vmatprep.subr.mxu0 0.0
    %689 = vmatpush1.msra.mxu0 0.0
    %690 = vmatprep.subr.mxu0 0.0
    %691 = vmatpush1.msra.mxu0 0.0
    %692 = vmatprep.subr.mxu0 0.0
    %693 = vmatpush1.msra.mxu0 0.0
    %694 = vmatprep.subr.mxu0 0.0
    %695 = vmatpush1.msra.mxu0 0.0
    %696 = vmatprep.subr.mxu0 0.0
    %697 = vmatpush1.msra.mxu0 0.0
    %698 = vmatprep.subr.mxu0 0.0
    %699 = vmatpush1.msra.mxu0 0.0
    %700 = vmatprep.subr.mxu0 0.0
    %701 = vmatpush1.msra.mxu0 0.0
    %702 = vmatprep.subr.mxu0 0.0
    %703 = vmatpush1.msra.mxu0 0.0
    %704 = vmatprep.subr.mxu0 0.0
    %705 = vmatpush1.msra.mxu0 0.0
    %706 = vmatprep.mubr.f32.mxu0 0.0
    %707 = vmatmul.mubr.f32.gmra.mrb[0].mxu0 %v640
    %v708 = vpop.f32.mrb[0].mxu0
    %v709 = vadd.f32 %v637, %v708
    %v710 = vpop.f32.mrb[0].mxu0
    %711 = vdwg.mxu0
    %v712 = vld [vmem:[%s10] sm:$0x1]
    %v713 = vadd.f32 %v709, %v712
    %v714 = vxor.u32 %v713, 2147483648
    %v715 = vmul.f32 %v714, 1.442695
    %v716 = vpow.pop %v715
    %v717 = vadd.f32 %v716, 1.0
    %v718 = vrcp.pop %v717
    %v719 = vmul.f32 1.0, %v718
    %v720 = vmul.f32 %v713, %v719
    %v721 = vld [vmem:[%s11] sm:$0xff]
    %v722 = vld [vmem:[%s11 + $0x8] sm:$0xff]
    %v723 = vld [vmem:[%s11 + $0x10] sm:$0xff]
    %v724 = vld [vmem:[%s11 + $0x18] sm:$0xff]
    %v725 = vld [vmem:[%s12] sm:$0x1]
    %v727 = vsel %vm567, %v720, 0
    %729 = vmatprep.subr.mxu0 0.0
    %730 = vmatpush1.msra.mxu0 %v721
    %731 = vmatprep.subr.mxu0 0.0
    %732 = vmatpush1.msra.mxu0 %v722
    %733 = vmatprep.subr.mxu0 0.0
    %734 = vmatpush1.msra.mxu0 %v723
    %735 = vmatprep.subr.mxu0 0.0
    %736 = vmatpush1.msra.mxu0 %v724
    %737 = vmatprep.subr.mxu0 0.0
    %738 = vmatpush1.msra.mxu0 0.0
    %739 = vmatprep.subr.mxu0 0.0
    %740 = vmatpush1.msra.mxu0 0.0
    %741 = vmatprep.subr.mxu0 0.0
    %742 = vmatpush1.msra.mxu0 0.0
    %743 = vmatprep.subr.mxu0 0.0
    %744 = vmatpush1.msra.mxu0 0.0
    %745 = vmatprep.subr.mxu0 0.0
    %746 = vmatpush1.msra.mxu0 0.0
    %747 = vmatprep.subr.mxu0 0.0
    %748 = vmatpush1.msra.mxu0 0.0
    %749 = vmatprep.subr.mxu0 0.0
    %750 = vmatpush1.msra.mxu0 0.0
    %751 = vmatprep.subr.mxu0 0.0
    %752 = vmatpush1.msra.mxu0 0.0
    %753 = vmatprep.subr.mxu0 0.0
    %754 = vmatpush1.msra.mxu0 0.0
    %755 = vmatprep.subr.mxu0 0.0
    %756 = vmatpush1.msra.mxu0 0.0
    %757 = vmatprep.subr.mxu0 0.0
    %758 = vmatpush1.msra.mxu0 0.0
    %759 = vmatprep.subr.mxu0 0.0
    %760 = vmatpush1.msra.mxu0 0.0
    %761 = vmatprep.subr.mxu0 0.0
    %762 = vmatpush1.msra.mxu0 0.0
    %763 = vmatprep.subr.mxu0 0.0
    %764 = vmatpush1.msra.mxu0 0.0
    %765 = vmatprep.subr.mxu0 0.0
    %766 = vmatpush1.msra.mxu0 0.0
    %767 = vmatprep.subr.mxu0 0.0
    %768 = vmatpush1.msra.mxu0 0.0
    %769 = vmatprep.subr.mxu0 0.0
    %770 = vmatpush1.msra.mxu0 0.0
    %771 = vmatprep.subr.mxu0 0.0
    %772 = vmatpush1.msra.mxu0 0.0
    %773 = vmatprep.subr.mxu0 0.0
    %774 = vmatpush1.msra.mxu0 0.0
    %775 = vmatprep.subr.mxu0 0.0
    %776 = vmatpush1.msra.mxu0 0.0
    %777 = vmatprep.subr.mxu0 0.0
    %778 = vmatpush1.msra.mxu0 0.0
    %779 = vmatprep.subr.mxu0 0.0
    %780 = vmatpush1.msra.mxu0 0.0
    %781 = vmatprep.subr.mxu0 0.0
    %782 = vmatpush1.msra.mxu0 0.0
    %783 = vmatprep.subr.mxu0 0.0
    %784 = vmatpush1.msra.mxu0 0.0
    %785 = vmatprep.subr.mxu0 0.0
    %786 = vmatpush1.msra.mxu0 0.0
    %787 = vmatprep.subr.mxu0 0.0
    %788 = vmatpush1.msra.mxu0 0.0
    %789 = vmatprep.subr.mxu0 0.0
    %790 = vmatpush1.msra.mxu0 0.0
    %791 = vmatprep.subr.mxu0 0.0
    %792 = vmatpush1.msra.mxu0 0.0
    %793 = vmatprep.mubr.f32.mxu0 0.0
    %794 = vmatmul.mubr.f32.gmra.mrb[0].mxu0 %v727
    %v795 = vpop.f32.mrb[0].mxu0
    %v796 = vadd.f32 %v725, %v795
    %v797 = vpop.f32.mrb[0].mxu0
    %798 = vdwg.mxu0
    %v799 = vxor.u32 %v796, 2147483648
    %v800 = vmul.f32 %v799, 1.442695
    %v801 = vpow.pop %v800
    %v802 = vadd.f32 %v801, 1.0
    %v803 = vrcp.pop %v802
    %v804 = vmul.f32 1.0, %v803
    %v805 = vmul.f32 %v796, %v804
    %v806 = vld [vmem:[%s13] sm:$0xff]
    %v807 = vld [vmem:[%s13 + $0x8] sm:$0xff]
    %v808 = vld [vmem:[%s14] sm:$0x1]
    %vm809 = vcmask 130048
    %v811 = vsel %vm809, %v805, 0
    %813 = vmatprep.subr.mxu0 0.0
    %814 = vmatpush1.msra.mxu0 %v806
    %815 = vmatprep.subr.mxu0 0.0
    %816 = vmatpush1.msra.mxu0 %v807
    %817 = vmatprep.subr.mxu0 0.0
    %818 = vmatpush1.msra.mxu0 0.0
    %819 = vmatprep.subr.mxu0 0.0
    %820 = vmatpush1.msra.mxu0 0.0
    %821 = vmatprep.subr.mxu0 0.0
    %822 = vmatpush1.msra.mxu0 0.0
    %823 = vmatprep.subr.mxu0 0.0
    %824 = vmatpush1.msra.mxu0 0.0
    %825 = vmatprep.subr.mxu0 0.0
    %826 = vmatpush1.msra.mxu0 0.0
    %827 = vmatprep.subr.mxu0 0.0
    %828 = vmatpush1.msra.mxu0 0.0
    %829 = vmatprep.subr.mxu0 0.0
    %830 = vmatpush1.msra.mxu0 0.0
    %831 = vmatprep.subr.mxu0 0.0
    %832 = vmatpush1.msra.mxu0 0.0
    %833 = vmatprep.subr.mxu0 0.0
    %834 = vmatpush1.msra.mxu0 0.0
    %835 = vmatprep.subr.mxu0 0.0
    %836 = vmatpush1.msra.mxu0 0.0
    %837 = vmatprep.subr.mxu0 0.0
    %838 = vmatpush1.msra.mxu0 0.0
    %839 = vmatprep.subr.mxu0 0.0
    %840 = vmatpush1.msra.mxu0 0.0
    %841 = vmatprep.subr.mxu0 0.0
    %842 = vmatpush1.msra.mxu0 0.0
    %843 = vmatprep.subr.mxu0 0.0
    %844 = vmatpush1.msra.mxu0 0.0
    %845 = vmatprep.subr.mxu0 0.0
    %846 = vmatpush1.msra.mxu0 0.0
    %847 = vmatprep.subr.mxu0 0.0
    %848 = vmatpush1.msra.mxu0 0.0
    %849 = vmatprep.subr.mxu0 0.0
    %850 = vmatpush1.msra.mxu0 0.0
    %851 = vmatprep.subr.mxu0 0.0
    %852 = vmatpush1.msra.mxu0 0.0
    %853 = vmatprep.subr.mxu0 0.0
    %854 = vmatpush1.msra.mxu0 0.0
    %855 = vmatprep.subr.mxu0 0.0
    %856 = vmatpush1.msra.mxu0 0.0
    %857 = vmatprep.subr.mxu0 0.0
    %858 = vmatpush1.msra.mxu0 0.0
    %859 = vmatprep.subr.mxu0 0.0
    %860 = vmatpush1.msra.mxu0 0.0
    %861 = vmatprep.subr.mxu0 0.0
    %862 = vmatpush1.msra.mxu0 0.0
    %863 = vmatprep.subr.mxu0 0.0
    %864 = vmatpush1.msra.mxu0 0.0
    %865 = vmatprep.subr.mxu0 0.0
    %866 = vmatpush1.msra.mxu0 0.0
    %867 = vmatprep.subr.mxu0 0.0
    %868 = vmatpush1.msra.mxu0 0.0
    %869 = vmatprep.subr.mxu0 0.0
    %870 = vmatpush1.msra.mxu0 0.0
    %871 = vmatprep.subr.mxu0 0.0
    %872 = vmatpush1.msra.mxu0 0.0
    %873 = vmatprep.subr.mxu0 0.0
    %874 = vmatpush1.msra.mxu0 0.0
    %875 = vmatprep.subr.mxu0 0.0
    %876 = vmatpush1.msra.mxu0 0.0
    %877 = vmatprep.mubr.f32.mxu0 0.0
    %878 = vmatmul.mubr.f32.gmra.mrb[0].mxu0 %v811
    %v879 = vpop.f32.mrb[0].mxu0
    %v880 = vadd.f32 %v808, %v879
    %v881 = vpop.f32.mrb[0].mxu0
    %882 = vdwg.mxu0
    %vm883 = vcmask 32768
    %v884 = vsel %vm883, %v880, -inf
    %885 = vmax.xlane.f32.xlu0 %v884
    %v886 = vpop.xlane.xlu0 %885
    %v887 = vsub.f32 %v880, %v886
    %v888 = vmul.f32 %v887, 1.442695
    %v889 = vpow.pop %v888
    %v890 = vsel %vm883, %v889, 0.0
    %891 = vadd.xlane.f32.xlu0 %v890
    %v892 = vpop.xlane.xlu0 %891
    %v893 = vrcp.pop %v892
    %v894 = vmul.f32 %v889, %v893
    %895 = vst.msk [vmem:[#allocation4] sm:$0x1] %vm883, %v894
    %v896 = vsel %vm883, %v894, -inf
    %897 = vmax.xlane.f32.xlu0 %v896
    %v898 = vpop.xlane.xlu0 %897
    %v899 = vsub.f32 %v894, %v898
    %v900 = vmul.f32 %v899, 1.442695
    %v901 = vpow.pop %v900
    %v902 = vsel %vm883, %v901, 0.0
    %903 = vadd.xlane.f32.xlu0 %v902
    %v904 = vpop.xlane.xlu0 %903
    %v905 = vlog2.pop %v904
    %v906 = vmul.f32 %v905, 0.6931472
    %v907 = vadd.f32 %v906, %v898
    %908 = vset.pattern.permute.xlu0 0
    %909 = vperm.xlu0 %908, %v63
    %v910 = vpop.permute.xlu0 %909
    %vm911 = vcmp.eq.s32.totalorder %v65, %v910
    %v912 = vsel %vm911, 1, 0
    %v913 = vcvt.s32.f32 %v912
    %v914 = vmul.f32 %v894, %v913
    %v915 = vsel %vm883, %v914, 0.0
    %916 = vadd.xlane.f32.xlu0 %v915
    %v917 = vpop.xlane.xlu0 %916
    %v918 = vsub.f32 %v907, %v917
    %v919 = vadd.f32 %v918, 0.0
    %v920 = vld [vmem:[%s0 + $0x8] sm:$0xff]
    %922 = vrot.lane.b32.xlu0 %v920, 7
    %v923 = vpop.permute.xlu0 %922
    %925 = vst.msk [vmem:[#allocation2 + $0xb] sm:$0xff] %vm71, %v923
    %v926 = vld [vmem:[#allocation2 + $0xa] sm:$0xff]
    %v927 = vld [vmem:[%s2] sm:$0xff]
    %v928 = vld [vmem:[%s2 + $0x8] sm:$0xff]
    %v929 = vld [vmem:[%s2 + $0x10] sm:$0xff]
    %v930 = vld [vmem:[%s2 + $0x18] sm:$0x7f]
    %v931 = vld [vmem:[#allocation2 + $0xb] sm:$0xff]
    %v932 = vld [vmem:[%s3] sm:$0xff]
    %v933 = vld [vmem:[%s3 + $0x8] sm:$0xff]
    %v934 = vld [vmem:[%s3 + $0x10] sm:$0xff]
    %v935 = vld [vmem:[%s3 + $0x18] sm:$0x7f]
    %v937 = vsel %vm54, %v931, 0
    %v940 = vsel %vm86, %v935, 0
    %942 = vmatprep.subr.mxu0 0.0
    %943 = vmatpush1.msra.mxu0 %v932
    %944 = vmatprep.subr.mxu0 0.0
    %945 = vmatpush1.msra.mxu0 %v933
    %946 = vmatprep.subr.mxu0 0.0
    %947 = vmatpush1.msra.mxu0 %v934
    %948 = vmatprep.subr.mxu0 0.0
    %949 = vmatpush1.msra.mxu0 %v940
    %950 = vmatprep.subr.mxu0 0.0
    %951 = vmatpush1.msra.mxu0 0.0
    %952 = vmatprep.subr.mxu0 0.0
    %953 = vmatpush1.msra.mxu0 0.0
    %954 = vmatprep.subr.mxu0 0.0
    %955 = vmatpush1.msra.mxu0 0.0
    %956 = vmatprep.subr.mxu0 0.0
    %957 = vmatpush1.msra.mxu0 0.0
    %958 = vmatprep.subr.mxu0 0.0
    %959 = vmatpush1.msra.mxu0 0.0
    %960 = vmatprep.subr.mxu0 0.0
    %961 = vmatpush1.msra.mxu0 0.0
    %962 = vmatprep.subr.mxu0 0.0
    %963 = vmatpush1.msra.mxu0 0.0
    %964 = vmatprep.subr.mxu0 0.0
    %965 = vmatpush1.msra.mxu0 0.0
    %966 = vmatprep.subr.mxu0 0.0
    %967 = vmatpush1.msra.mxu0 0.0
    %968 = vmatprep.subr.mxu0 0.0
    %969 = vmatpush1.msra.mxu0 0.0
    %970 = vmatprep.subr.mxu0 0.0
    %971 = vmatpush1.msra.mxu0 0.0
    %972 = vmatprep.subr.mxu0 0.0
    %973 = vmatpush1.msra.mxu0 0.0
    %974 = vmatprep.subr.mxu0 0.0
    %975 = vmatpush1.msra.mxu0 0.0
    %976 = vmatprep.subr.mxu0 0.0
    %977 = vmatpush1.msra.mxu0 0.0
    %978 = vmatprep.subr.mxu0 0.0
    %979 = vmatpush1.msra.mxu0 0.0
    %980 = vmatprep.subr.mxu0 0.0
    %981 = vmatpush1.msra.mxu0 0.0
    %982 = vmatprep.subr.mxu0 0.0
    %983 = vmatpush1.msra.mxu0 0.0
    %984 = vmatprep.subr.mxu0 0.0
    %985 = vmatpush1.msra.mxu0 0.0
    %986 = vmatprep.subr.mxu0 0.0
    %987 = vmatpush1.msra.mxu0 0.0
    %988 = vmatprep.subr.mxu0 0.0
    %989 = vmatpush1.msra.mxu0 0.0
    %990 = vmatprep.subr.mxu0 0.0
    %991 = vmatpush1.msra.mxu0 0.0
    %992 = vmatprep.subr.mxu0 0.0
    %993 = vmatpush1.msra.mxu0 0.0
    %994 = vmatprep.subr.mxu0 0.0
    %995 = vmatpush1.msra.mxu0 0.0
    %996 = vmatprep.subr.mxu0 0.0
    %997 = vmatpush1.msra.mxu0 0.0
    %998 = vmatprep.subr.mxu0 0.0
    %999 = vmatpush1.msra.mxu0 0.0
    %1000 = vmatprep.subr.mxu0 0.0
    %1001 = vmatpush1.msra.mxu0 0.0
    %1002 = vmatprep.subr.mxu0 0.0
    %1003 = vmatpush1.msra.mxu0 0.0
    %1004 = vmatprep.subr.mxu0 0.0
    %1005 = vmatpush1.msra.mxu0 0.0
    %1006 = vmatprep.mubr.f32.mxu0 0.0
    %1007 = vmatmul.mubr.f32.gmra.mrb[0].mxu0 %v937
    %v1008 = vpop.f32.mrb[0].mxu0
    %v1009 = vadd.f32 0.0, %v1008
    %v1010 = vpop.f32.mrb[0].mxu0
    %1011 = vdwg.mxu0
    %v1013 = vsel %vm54, %v926, 0
    %v1016 = vsel %vm86, %v930, 0
    %1018 = vmatprep.subr.mxu0 0.0
    %1019 = vmatpush1.msra.mxu0 %v927
    %1020 = vmatprep.subr.mxu0 0.0
    %1021 = vmatpush1.msra.mxu0 %v928
    %1022 = vmatprep.subr.mxu0 0.0
    %1023 = vmatpush1.msra.mxu0 %v929
    %1024 = vmatprep.subr.mxu0 0.0
    %1025 = vmatpush1.msra.mxu0 %v1016
    %1026 = vmatprep.subr.mxu0 0.0
    %1027 = vmatpush1.msra.mxu0 0.0
    %1028 = vmatprep.subr.mxu0 0.0
    %1029 = vmatpush1.msra.mxu0 0.0
    %1030 = vmatprep.subr.mxu0 0.0
    %1031 = vmatpush1.msra.mxu0 0.0
    %1032 = vmatprep.subr.mxu0 0.0
    %1033 = vmatpush1.msra.mxu0 0.0
    %1034 = vmatprep.subr.mxu0 0.0
    %1035 = vmatpush1.msra.mxu0 0.0
    %1036 = vmatprep.subr.mxu0 0.0
    %1037 = vmatpush1.msra.mxu0 0.0
    %1038 = vmatprep.subr.mxu0 0.0
    %1039 = vmatpush1.msra.mxu0 0.0
    %1040 = vmatprep.subr.mxu0 0.0
    %1041 = vmatpush1.msra.mxu0 0.0
    %1042 = vmatprep.subr.mxu0 0.0
    %1043 = vmatpush1.msra.mxu0 0.0
    %1044 = vmatprep.subr.mxu0 0.0
    %1045 = vmatpush1.msra.mxu0 0.0
    %1046 = vmatprep.subr.mxu0 0.0
    %1047 = vmatpush1.msra.mxu0 0.0
    %1048 = vmatprep.subr.mxu0 0.0
    %1049 = vmatpush1.msra.mxu0 0.0
    %1050 = vmatprep.subr.mxu0 0.0
    %1051 = vmatpush1.msra.mxu0 0.0
    %1052 = vmatprep.subr.mxu0 0.0
    %1053 = vmatpush1.msra.mxu0 0.0
    %1054 = vmatprep.subr.mxu0 0.0
    %1055 = vmatpush1.msra.mxu0 0.0
    %1056 = vmatprep.subr.mxu0 0.0
    %1057 = vmatpush1.msra.mxu0 0.0
    %1058 = vmatprep.subr.mxu0 0.0
    %1059 = vmatpush1.msra.mxu0 0.0
    %1060 = vmatprep.subr.mxu0 0.0
    %1061 = vmatpush1.msra.mxu0 0.0
    %1062 = vmatprep.subr.mxu0 0.0
    %1063 = vmatpush1.msra.mxu0 0.0
    %1064 = vmatprep.subr.mxu0 0.0
    %1065 = vmatpush1.msra.mxu0 0.0
    %1066 = vmatprep.subr.mxu0 0.0
    %1067 = vmatpush1.msra.mxu0 0.0
    %1068 = vmatprep.subr.mxu0 0.0
    %1069 = vmatpush1.msra.mxu0 0.0
    %1070 = vmatprep.subr.mxu0 0.0
    %1071 = vmatpush1.msra.mxu0 0.0
    %1072 = vmatprep.subr.mxu0 0.0
    %1073 = vmatpush1.msra.mxu0 0.0
    %1074 = vmatprep.subr.mxu0 0.0
    %1075 = vmatpush1.msra.mxu0 0.0
    %1076 = vmatprep.subr.mxu0 0.0
    %1077 = vmatpush1.msra.mxu0 0.0
    %1078 = vmatprep.subr.mxu0 0.0
    %1079 = vmatpush1.msra.mxu0 0.0
    %1080 = vmatprep.subr.mxu0 0.0
    %1081 = vmatpush1.msra.mxu0 0.0
    %1082 = vmatprep.mubr.f32.mxu0 0.0
    %1083 = vmatmul.mubr.f32.gmra.mrb[0].mxu0 %v1013
    %v1084 = vpop.f32.mrb[0].mxu0
    %v1085 = vadd.f32 %v1009, %v1084
    %v1086 = vpop.f32.mrb[0].mxu0
    %1087 = vdwg.mxu0
    %v1088 = vld [vmem:[#allocation2 + $0xc] sm:$0xff]
    %v1089 = vld [vmem:[%s4] sm:$0xff]
    %v1090 = vld [vmem:[%s4 + $0x8] sm:$0xff]
    %v1091 = vld [vmem:[%s4 + $0x10] sm:$0xff]
    %v1092 = vld [vmem:[%s4 + $0x18] sm:$0x7f]
    %v1094 = vsel %vm54, %v1088, 0
    %v1097 = vsel %vm86, %v1092, 0
    %1099 = vmatprep.subr.mxu0 0.0
    %1100 = vmatpush1.msra.mxu0 %v1089
    %1101 = vmatprep.subr.mxu0 0.0
    %1102 = vmatpush1.msra.mxu0 %v1090
    %1103 = vmatprep.subr.mxu0 0.0
    %1104 = vmatpush1.msra.mxu0 %v1091
    %1105 = vmatprep.subr.mxu0 0.0
    %1106 = vmatpush1.msra.mxu0 %v1097
    %1107 = vmatprep.subr.mxu0 0.0
    %1108 = vmatpush1.msra.mxu0 0.0
    %1109 = vmatprep.subr.mxu0 0.0
    %1110 = vmatpush1.msra.mxu0 0.0
    %1111 = vmatprep.subr.mxu0 0.0
    %1112 = vmatpush1.msra.mxu0 0.0
    %1113 = vmatprep.subr.mxu0 0.0
    %1114 = vmatpush1.msra.mxu0 0.0
    %1115 = vmatprep.subr.mxu0 0.0
    %1116 = vmatpush1.msra.mxu0 0.0
    %1117 = vmatprep.subr.mxu0 0.0
    %1118 = vmatpush1.msra.mxu0 0.0
    %1119 = vmatprep.subr.mxu0 0.0
    %1120 = vmatpush1.msra.mxu0 0.0
    %1121 = vmatprep.subr.mxu0 0.0
    %1122 = vmatpush1.msra.mxu0 0.0
    %1123 = vmatprep.subr.mxu0 0.0
    %1124 = vmatpush1.msra.mxu0 0.0
    %1125 = vmatprep.subr.mxu0 0.0
    %1126 = vmatpush1.msra.mxu0 0.0
    %1127 = vmatprep.subr.mxu0 0.0
    %1128 = vmatpush1.msra.mxu0 0.0
    %1129 = vmatprep.subr.mxu0 0.0
    %1130 = vmatpush1.msra.mxu0 0.0
    %1131 = vmatprep.subr.mxu0 0.0
    %1132 = vmatpush1.msra.mxu0 0.0
    %1133 = vmatprep.subr.mxu0 0.0
    %1134 = vmatpush1.msra.mxu0 0.0
    %1135 = vmatprep.subr.mxu0 0.0
    %1136 = vmatpush1.msra.mxu0 0.0
    %1137 = vmatprep.subr.mxu0 0.0
    %1138 = vmatpush1.msra.mxu0 0.0
    %1139 = vmatprep.subr.mxu0 0.0
    %1140 = vmatpush1.msra.mxu0 0.0
    %1141 = vmatprep.subr.mxu0 0.0
    %1142 = vmatpush1.msra.mxu0 0.0
    %1143 = vmatprep.subr.mxu0 0.0
    %1144 = vmatpush1.msra.mxu0 0.0
    %1145 = vmatprep.subr.mxu0 0.0
    %1146 = vmatpush1.msra.mxu0 0.0
    %1147 = vmatprep.subr.mxu0 0.0
    %1148 = vmatpush1.msra.mxu0 0.0
    %1149 = vmatprep.subr.mxu0 0.0
    %1150 = vmatpush1.msra.mxu0 0.0
    %1151 = vmatprep.subr.mxu0 0.0
    %1152 = vmatpush1.msra.mxu0 0.0
    %1153 = vmatprep.subr.mxu0 0.0
    %1154 = vmatpush1.msra.mxu0 0.0
    %1155 = vmatprep.subr.mxu0 0.0
    %1156 = vmatpush1.msra.mxu0 0.0
    %1157 = vmatprep.subr.mxu0 0.0
    %1158 = vmatpush1.msra.mxu0 0.0
    %1159 = vmatprep.subr.mxu0 0.0
    %1160 = vmatpush1.msra.mxu0 0.0
    %1161 = vmatprep.subr.mxu0 0.0
    %1162 = vmatpush1.msra.mxu0 0.0
    %1163 = vmatprep.mubr.f32.mxu0 0.0
    %1164 = vmatmul.mubr.f32.gmra.mrb[0].mxu0 %v1094
    %v1165 = vpop.f32.mrb[0].mxu0
    %v1166 = vadd.f32 0.0, %v1165
    %v1167 = vpop.f32.mrb[0].mxu0
    %1168 = vdwg.mxu0
    %v1169 = vadd.f32 %v1085, %v1166
    %v1170 = vld [vmem:[%s5] sm:$0x1]
    %v1172 = vlaneseq
    %v1173 = vshrl.u32 %v1172, 7
    %v1174 = vsub.s32 0, %v1173
    %v1175 = vrot.slane %v1170, %v1174
    %v1177 = vadd.f32 %v1169, %v1175
    %v1178 = vxor.u32 %v1177, 2147483648
    %v1179 = vmul.f32 %v1178, 1.442695
    %v1180 = vpow.pop %v1179
    %v1181 = vadd.f32 %v1180, 1.0
    %v1182 = vrcp.pop %v1181
    %v1183 = vmul.f32 1.0, %v1182
    %v1184 = vmul.f32 %v1177, %v1183
    %1186 = vrot.lane.b32.xlu0 %v1184, 96
    %v1187 = vpop.permute.xlu0 %1186
    %v1189 = vmax.f32 %v1184, %v1187
    %v1191 = vrot.slane %v1189, 1
    %v1193 = vmax.f32 %v1189, %v1191
    %1195 = vrot.lane.b32.xlu0 %v1193, 28
    %v1196 = vpop.permute.xlu0 %1195
    %1198 = vst.msk [vmem:[#allocation3 + $0x5] sm:$0x1] %vm346, %v1196
    %1199 = vst.msk [vmem:[#allocation3 + $0x4] sm:$0x4] %vm348, %v1196
    %1200 = vst.msk [vmem:[#allocation3 + $0x3] sm:$0x10] %vm350, %v1196
    %1201 = vst.msk [vmem:[#allocation3 + $0x2] sm:$0x40] %vm352, %v1196
    %v1202 = vld [vmem:[#allocation3 + $0x5] sm:$0xf]
    %v1203 = vld [vmem:[%s6] sm:$0xff]
    %v1204 = vld [vmem:[%s6 + $0x8] sm:$0xff]
    %v1205 = vld [vmem:[%s6 + $0x10] sm:$0xff]
    %v1206 = vld [vmem:[%s6 + $0x18] sm:$0xff]
    %v1207 = vld [vmem:[%s6 + $0x20] sm:$0xff]
    %v1208 = vld [vmem:[%s6 + $0x28] sm:$0xff]
    %v1209 = vld [vmem:[%s6 + $0x30] sm:$0xff]
    %v1210 = vld [vmem:[%s6 + $0x38] sm:$0xff]
    %v1211 = vld [vmem:[%s6 + $0x40] sm:$0xff]
    %v1212 = vld [vmem:[%s6 + $0x48] sm:$0xff]
    %v1213 = vld [vmem:[%s6 + $0x50] sm:$0xff]
    %v1214 = vld [vmem:[%s6 + $0x58] sm:$0xf]
    %v1215 = vld [vmem:[#allocation3 + $0x6] sm:$0xf]
    %v1216 = vld [vmem:[%s7] sm:$0xff]
    %v1217 = vld [vmem:[%s7 + $0x8] sm:$0xff]
    %v1218 = vld [vmem:[%s7 + $0x10] sm:$0xff]
    %v1219 = vld [vmem:[%s7 + $0x18] sm:$0xff]
    %v1220 = vld [vmem:[%s7 + $0x20] sm:$0xff]
    %v1221 = vld [vmem:[%s7 + $0x28] sm:$0xff]
    %v1222 = vld [vmem:[%s7 + $0x30] sm:$0xff]
    %v1223 = vld [vmem:[%s7 + $0x38] sm:$0xff]
    %v1224 = vld [vmem:[%s7 + $0x40] sm:$0xff]
    %v1225 = vld [vmem:[%s7 + $0x48] sm:$0xff]
    %v1226 = vld [vmem:[%s7 + $0x50] sm:$0xff]
    %v1227 = vld [vmem:[%s7 + $0x58] sm:$0xf]
    %v1229 = vsel %vm59, %v1215, 0
    %v1232 = vsel %vm383, %v1227, 0
    %1234 = vmatprep.subr.mxu0 0.0
    %1235 = vmatpush1.msra.mxu0 %v1216
    %1236 = vmatprep.subr.mxu0 0.0
    %1237 = vmatpush1.msra.mxu0 %v1217
    %1238 = vmatprep.subr.mxu0 0.0
    %1239 = vmatpush1.msra.mxu0 %v1218
    %1240 = vmatprep.subr.mxu0 0.0
    %1241 = vmatpush1.msra.mxu0 %v1219
    %1242 = vmatprep.subr.mxu0 0.0
    %1243 = vmatpush1.msra.mxu0 %v1220
    %1244 = vmatprep.subr.mxu0 0.0
    %1245 = vmatpush1.msra.mxu0 %v1221
    %1246 = vmatprep.subr.mxu0 0.0
    %1247 = vmatpush1.msra.mxu0 %v1222
    %1248 = vmatprep.subr.mxu0 0.0
    %1249 = vmatpush1.msra.mxu0 %v1223
    %1250 = vmatprep.subr.mxu0 0.0
    %1251 = vmatpush1.msra.mxu0 %v1224
    %1252 = vmatprep.subr.mxu0 0.0
    %1253 = vmatpush1.msra.mxu0 %v1225
    %1254 = vmatprep.subr.mxu0 0.0
    %1255 = vmatpush1.msra.mxu0 %v1226
    %1256 = vmatprep.subr.mxu0 0.0
    %1257 = vmatpush1.msra.mxu0 %v1232
    %1258 = vmatprep.subr.mxu0 0.0
    %1259 = vmatpush1.msra.mxu0 0.0
    %1260 = vmatprep.subr.mxu0 0.0
    %1261 = vmatpush1.msra.mxu0 0.0
    %1262 = vmatprep.subr.mxu0 0.0
    %1263 = vmatpush1.msra.mxu0 0.0
    %1264 = vmatprep.subr.mxu0 0.0
    %1265 = vmatpush1.msra.mxu0 0.0
    %1266 = vmatprep.subr.mxu0 0.0
    %1267 = vmatpush1.msra.mxu0 0.0
    %1268 = vmatprep.subr.mxu0 0.0
    %1269 = vmatpush1.msra.mxu0 0.0
    %1270 = vmatprep.subr.mxu0 0.0
    %1271 = vmatpush1.msra.mxu0 0.0
    %1272 = vmatprep.subr.mxu0 0.0
    %1273 = vmatpush1.msra.mxu0 0.0
    %1274 = vmatprep.subr.mxu0 0.0
    %1275 = vmatpush1.msra.mxu0 0.0
    %1276 = vmatprep.subr.mxu0 0.0
    %1277 = vmatpush1.msra.mxu0 0.0
    %1278 = vmatprep.subr.mxu0 0.0
    %1279 = vmatpush1.msra.mxu0 0.0
    %1280 = vmatprep.subr.mxu0 0.0
    %1281 = vmatpush1.msra.mxu0 0.0
    %1282 = vmatprep.subr.mxu0 0.0
    %1283 = vmatpush1.msra.mxu0 0.0
    %1284 = vmatprep.subr.mxu0 0.0
    %1285 = vmatpush1.msra.mxu0 0.0
    %1286 = vmatprep.subr.mxu0 0.0
    %1287 = vmatpush1.msra.mxu0 0.0
    %1288 = vmatprep.subr.mxu0 0.0
    %1289 = vmatpush1.msra.mxu0 0.0
    %1290 = vmatprep.subr.mxu0 0.0
    %1291 = vmatpush1.msra.mxu0 0.0
    %1292 = vmatprep.subr.mxu0 0.0
    %1293 = vmatpush1.msra.mxu0 0.0
    %1294 = vmatprep.subr.mxu0 0.0
    %1295 = vmatpush1.msra.mxu0 0.0
    %1296 = vmatprep.subr.mxu0 0.0
    %1297 = vmatpush1.msra.mxu0 0.0
    %1298 = vmatprep.mubr.f32.mxu0 0.0
    %1299 = vmatmul.mubr.f32.gmra.mrb[0].mxu0 %v1229
    %v1300 = vpop.f32.mrb[0].mxu0
    %v1301 = vadd.f32 0.0, %v1300
    %v1302 = vpop.f32.mrb[0].mxu0
    %1303 = vdwg.mxu0
    %v1305 = vsel %vm59, %v1202, 0
    %v1308 = vsel %vm383, %v1214, 0
    %1310 = vmatprep.subr.mxu0 0.0
    %1311 = vmatpush1.msra.mxu0 %v1203
    %1312 = vmatprep.subr.mxu0 0.0
    %1313 = vmatpush1.msra.mxu0 %v1204
    %1314 = vmatprep.subr.mxu0 0.0
    %1315 = vmatpush1.msra.mxu0 %v1205
    %1316 = vmatprep.subr.mxu0 0.0
    %1317 = vmatpush1.msra.mxu0 %v1206
    %1318 = vmatprep.subr.mxu0 0.0
    %1319 = vmatpush1.msra.mxu0 %v1207
    %1320 = vmatprep.subr.mxu0 0.0
    %1321 = vmatpush1.msra.mxu0 %v1208
    %1322 = vmatprep.subr.mxu0 0.0
    %1323 = vmatpush1.msra.mxu0 %v1209
    %1324 = vmatprep.subr.mxu0 0.0
    %1325 = vmatpush1.msra.mxu0 %v1210
    %1326 = vmatprep.subr.mxu0 0.0
    %1327 = vmatpush1.msra.mxu0 %v1211
    %1328 = vmatprep.subr.mxu0 0.0
    %1329 = vmatpush1.msra.mxu0 %v1212
    %1330 = vmatprep.subr.mxu0 0.0
    %1331 = vmatpush1.msra.mxu0 %v1213
    %1332 = vmatprep.subr.mxu0 0.0
    %1333 = vmatpush1.msra.mxu0 %v1308
    %1334 = vmatprep.subr.mxu0 0.0
    %1335 = vmatpush1.msra.mxu0 0.0
    %1336 = vmatprep.subr.mxu0 0.0
    %1337 = vmatpush1.msra.mxu0 0.0
    %1338 = vmatprep.subr.mxu0 0.0
    %1339 = vmatpush1.msra.mxu0 0.0
    %1340 = vmatprep.subr.mxu0 0.0
    %1341 = vmatpush1.msra.mxu0 0.0
    %1342 = vmatprep.subr.mxu0 0.0
    %1343 = vmatpush1.msra.mxu0 0.0
    %1344 = vmatprep.subr.mxu0 0.0
    %1345 = vmatpush1.msra.mxu0 0.0
    %1346 = vmatprep.subr.mxu0 0.0
    %1347 = vmatpush1.msra.mxu0 0.0
    %1348 = vmatprep.subr.mxu0 0.0
    %1349 = vmatpush1.msra.mxu0 0.0
    %1350 = vmatprep.subr.mxu0 0.0
    %1351 = vmatpush1.msra.mxu0 0.0
    %1352 = vmatprep.subr.mxu0 0.0
    %1353 = vmatpush1.msra.mxu0 0.0
    %1354 = vmatprep.subr.mxu0 0.0
    %1355 = vmatpush1.msra.mxu0 0.0
    %1356 = vmatprep.subr.mxu0 0.0
    %1357 = vmatpush1.msra.mxu0 0.0
    %1358 = vmatprep.subr.mxu0 0.0
    %1359 = vmatpush1.msra.mxu0 0.0
    %1360 = vmatprep.subr.mxu0 0.0
    %1361 = vmatpush1.msra.mxu0 0.0
    %1362 = vmatprep.subr.mxu0 0.0
    %1363 = vmatpush1.msra.mxu0 0.0
    %1364 = vmatprep.subr.mxu0 0.0
    %1365 = vmatpush1.msra.mxu0 0.0
    %1366 = vmatprep.subr.mxu0 0.0
    %1367 = vmatpush1.msra.mxu0 0.0
    %1368 = vmatprep.subr.mxu0 0.0
    %1369 = vmatpush1.msra.mxu0 0.0
    %1370 = vmatprep.subr.mxu0 0.0
    %1371 = vmatpush1.msra.mxu0 0.0
    %1372 = vmatprep.subr.mxu0 0.0
    %1373 = vmatpush1.msra.mxu0 0.0
    %1374 = vmatprep.mubr.f32.mxu0 0.0
    %1375 = vmatmul.mubr.f32.gmra.mrb[0].mxu0 %v1305
    %v1376 = vpop.f32.mrb[0].mxu0
    %v1377 = vadd.f32 %v1301, %v1376
    %v1378 = vpop.f32.mrb[0].mxu0
    %1379 = vdwg.mxu0
    %v1380 = vld [vmem:[%s8] sm:$0x1]
    %v1382 = vlaneseq
    %v1383 = vshrl.u32 %v1382, 7
    %v1384 = vsub.s32 0, %v1383
    %v1385 = vrot.slane %v1380, %v1384
    %v1387 = vadd.f32 %v1377, %v1385
    %v1388 = vxor.u32 %v1387, 2147483648
    %v1389 = vmul.f32 %v1388, 1.442695
    %v1390 = vpow.pop %v1389
    %v1391 = vadd.f32 %v1390, 1.0
    %v1392 = vrcp.pop %v1391
    %v1393 = vmul.f32 1.0, %v1392
    %v1394 = vmul.f32 %v1387, %v1393
    %1396 = vrot.lane.b32.xlu0 %v1394, 96
    %v1397 = vpop.permute.xlu0 %1396
    %v1399 = vmax.f32 %v1394, %v1397
    %v1401 = vrot.slane %v1399, 1
    %v1403 = vmax.f32 %v1399, %v1401
    %v1404 = vld [vmem:[%s9] sm:$0xff]
    %v1405 = vld [vmem:[%s9 + $0x8] sm:$0xff]
    %v1406 = vld [vmem:[%s9 + $0x10] sm:$0xff]
    %v1407 = vld [vmem:[%s9 + $0x18] sm:$0xff]
    %v1408 = vld [vmem:[%s9 + $0x20] sm:$0xff]
    %v1409 = vld [vmem:[%s9 + $0x28] sm:$0xff]
    %v1410 = vld [vmem:[%s9 + $0x30] sm:$0xff]
    %v1411 = vld [vmem:[%s9 + $0x38] sm:$0xff]
    %v1413 = vrot.slane %v1403, 2
    %v1414 = vsel %vm567, %v1413, 0
    %1416 = vmatprep.subr.mxu0 0.0
    %1417 = vmatpush1.msra.mxu0 %v1408
    %1418 = vmatprep.subr.mxu0 0.0
    %1419 = vmatpush1.msra.mxu0 %v1409
    %1420 = vmatprep.subr.mxu0 0.0
    %1421 = vmatpush1.msra.mxu0 %v1410
    %1422 = vmatprep.subr.mxu0 0.0
    %1423 = vmatpush1.msra.mxu0 %v1411
    %1424 = vmatprep.subr.mxu0 0.0
    %1425 = vmatpush1.msra.mxu0 0.0
    %1426 = vmatprep.subr.mxu0 0.0
    %1427 = vmatpush1.msra.mxu0 0.0
    %1428 = vmatprep.subr.mxu0 0.0
    %1429 = vmatpush1.msra.mxu0 0.0
    %1430 = vmatprep.subr.mxu0 0.0
    %1431 = vmatpush1.msra.mxu0 0.0
    %1432 = vmatprep.subr.mxu0 0.0
    %1433 = vmatpush1.msra.mxu0 0.0
    %1434 = vmatprep.subr.mxu0 0.0
    %1435 = vmatpush1.msra.mxu0 0.0
    %1436 = vmatprep.subr.mxu0 0.0
    %1437 = vmatpush1.msra.mxu0 0.0
    %1438 = vmatprep.subr.mxu0 0.0
    %1439 = vmatpush1.msra.mxu0 0.0
    %1440 = vmatprep.subr.mxu0 0.0
    %1441 = vmatpush1.msra.mxu0 0.0
    %1442 = vmatprep.subr.mxu0 0.0
    %1443 = vmatpush1.msra.mxu0 0.0
    %1444 = vmatprep.subr.mxu0 0.0
    %1445 = vmatpush1.msra.mxu0 0.0
    %1446 = vmatprep.subr.mxu0 0.0
    %1447 = vmatpush1.msra.mxu0 0.0
    %1448 = vmatprep.subr.mxu0 0.0
    %1449 = vmatpush1.msra.mxu0 0.0
    %1450 = vmatprep.subr.mxu0 0.0
    %1451 = vmatpush1.msra.mxu0 0.0
    %1452 = vmatprep.subr.mxu0 0.0
    %1453 = vmatpush1.msra.mxu0 0.0
    %1454 = vmatprep.subr.mxu0 0.0
    %1455 = vmatpush1.msra.mxu0 0.0
    %1456 = vmatprep.subr.mxu0 0.0
    %1457 = vmatpush1.msra.mxu0 0.0
    %1458 = vmatprep.subr.mxu0 0.0
    %1459 = vmatpush1.msra.mxu0 0.0
    %1460 = vmatprep.subr.mxu0 0.0
    %1461 = vmatpush1.msra.mxu0 0.0
    %1462 = vmatprep.subr.mxu0 0.0
    %1463 = vmatpush1.msra.mxu0 0.0
    %1464 = vmatprep.subr.mxu0 0.0
    %1465 = vmatpush1.msra.mxu0 0.0
    %1466 = vmatprep.subr.mxu0 0.0
    %1467 = vmatpush1.msra.mxu0 0.0
    %1468 = vmatprep.subr.mxu0 0.0
    %1469 = vmatpush1.msra.mxu0 0.0
    %1470 = vmatprep.subr.mxu0 0.0
    %1471 = vmatpush1.msra.mxu0 0.0
    %1472 = vmatprep.subr.mxu0 0.0
    %1473 = vmatpush1.msra.mxu0 0.0
    %1474 = vmatprep.subr.mxu0 0.0
    %1475 = vmatpush1.msra.mxu0 0.0
    %1476 = vmatprep.subr.mxu0 0.0
    %1477 = vmatpush1.msra.mxu0 0.0
    %1478 = vmatprep.subr.mxu0 0.0
    %1479 = vmatpush1.msra.mxu0 0.0
    %1480 = vmatprep.mubr.f32.mxu0 0.0
    %1481 = vmatmul.mubr.f32.gmra.mrb[0].mxu0 %v1414
    %v1482 = vpop.f32.mrb[0].mxu0
    %v1483 = vadd.f32 0.0, %v1482
    %v1484 = vpop.f32.mrb[0].mxu0
    %1485 = vdwg.mxu0
    %v1486 = vsel %vm567, %v1403, 0
    %1488 = vmatprep.subr.mxu0 0.0
    %1489 = vmatpush1.msra.mxu0 %v1404
    %1490 = vmatprep.subr.mxu0 0.0
    %1491 = vmatpush1.msra.mxu0 %v1405
    %1492 = vmatprep.subr.mxu0 0.0
    %1493 = vmatpush1.msra.mxu0 %v1406
    %1494 = vmatprep.subr.mxu0 0.0
    %1495 = vmatpush1.msra.mxu0 %v1407
    %1496 = vmatprep.subr.mxu0 0.0
    %1497 = vmatpush1.msra.mxu0 0.0
    %1498 = vmatprep.subr.mxu0 0.0
    %1499 = vmatpush1.msra.mxu0 0.0
    %1500 = vmatprep.subr.mxu0 0.0
    %1501 = vmatpush1.msra.mxu0 0.0
    %1502 = vmatprep.subr.mxu0 0.0
    %1503 = vmatpush1.msra.mxu0 0.0
    %1504 = vmatprep.subr.mxu0 0.0
    %1505 = vmatpush1.msra.mxu0 0.0
    %1506 = vmatprep.subr.mxu0 0.0
    %1507 = vmatpush1.msra.mxu0 0.0
    %1508 = vmatprep.subr.mxu0 0.0
    %1509 = vmatpush1.msra.mxu0 0.0
    %1510 = vmatprep.subr.mxu0 0.0
    %1511 = vmatpush1.msra.mxu0 0.0
    %1512 = vmatprep.subr.mxu0 0.0
    %1513 = vmatpush1.msra.mxu0 0.0
    %1514 = vmatprep.subr.mxu0 0.0
    %1515 = vmatpush1.msra.mxu0 0.0
    %1516 = vmatprep.subr.mxu0 0.0
    %1517 = vmatpush1.msra.mxu0 0.0
    %1518 = vmatprep.subr.mxu0 0.0
    %1519 = vmatpush1.msra.mxu0 0.0
    %1520 = vmatprep.subr.mxu0 0.0
    %1521 = vmatpush1.msra.mxu0 0.0
    %1522 = vmatprep.subr.mxu0 0.0
    %1523 = vmatpush1.msra.mxu0 0.0
    %1524 = vmatprep.subr.mxu0 0.0
    %1525 = vmatpush1.msra.mxu0 0.0
    %1526 = vmatprep.subr.mxu0 0.0
    %1527 = vmatpush1.msra.mxu0 0.0
    %1528 = vmatprep.subr.mxu0 0.0
    %1529 = vmatpush1.msra.mxu0 0.0
    %1530 = vmatprep.subr.mxu0 0.0
    %1531 = vmatpush1.msra.mxu0 0.0
    %1532 = vmatprep.subr.mxu0 0.0
    %1533 = vmatpush1.msra.mxu0 0.0
    %1534 = vmatprep.subr.mxu0 0.0
    %1535 = vmatpush1.msra.mxu0 0.0
    %1536 = vmatprep.subr.mxu0 0.0
    %1537 = vmatpush1.msra.mxu0 0.0
    %1538 = vmatprep.subr.mxu0 0.0
    %1539 = vmatpush1.msra.mxu0 0.0
    %1540 = vmatprep.subr.mxu0 0.0
    %1541 = vmatpush1.msra.mxu0 0.0
    %1542 = vmatprep.subr.mxu0 0.0
    %1543 = vmatpush1.msra.mxu0 0.0
    %1544 = vmatprep.subr.mxu0 0.0
    %1545 = vmatpush1.msra.mxu0 0.0
    %1546 = vmatprep.subr.mxu0 0.0
    %1547 = vmatpush1.msra.mxu0 0.0
    %1548 = vmatprep.subr.mxu0 0.0
    %1549 = vmatpush1.msra.mxu0 0.0
    %1550 = vmatprep.subr.mxu0 0.0
    %1551 = vmatpush1.msra.mxu0 0.0
    %1552 = vmatprep.mubr.f32.mxu0 0.0
    %1553 = vmatmul.mubr.f32.gmra.mrb[0].mxu0 %v1486
    %v1554 = vpop.f32.mrb[0].mxu0
    %v1555 = vadd.f32 %v1483, %v1554
    %v1556 = vpop.f32.mrb[0].mxu0
    %1557 = vdwg.mxu0
    %v1558 = vld [vmem:[%s10] sm:$0x1]
    %v1559 = vadd.f32 %v1555, %v1558
    %v1560 = vxor.u32 %v1559, 2147483648
    %v1561 = vmul.f32 %v1560, 1.442695
    %v1562 = vpow.pop %v1561
    %v1563 = vadd.f32 %v1562, 1.0
    %v1564 = vrcp.pop %v1563
    %v1565 = vmul.f32 1.0, %v1564
    %v1566 = vmul.f32 %v1559, %v1565
    %v1567 = vld [vmem:[%s11] sm:$0xff]
    %v1568 = vld [vmem:[%s11 + $0x8] sm:$0xff]
    %v1569 = vld [vmem:[%s11 + $0x10] sm:$0xff]
    %v1570 = vld [vmem:[%s11 + $0x18] sm:$0xff]
    %v1571 = vld [vmem:[%s12] sm:$0x1]
    %v1573 = vsel %vm567, %v1566, 0
    %1575 = vmatprep.subr.mxu0 0.0
    %1576 = vmatpush1.msra.mxu0 %v1567
    %1577 = vmatprep.subr.mxu0 0.0
    %1578 = vmatpush1.msra.mxu0 %v1568
    %1579 = vmatprep.subr.mxu0 0.0
    %1580 = vmatpush1.msra.mxu0 %v1569
    %1581 = vmatprep.subr.mxu0 0.0
    %1582 = vmatpush1.msra.mxu0 %v1570
    %1583 = vmatprep.subr.mxu0 0.0
    %1584 = vmatpush1.msra.mxu0 0.0
    %1585 = vmatprep.subr.mxu0 0.0
    %1586 = vmatpush1.msra.mxu0 0.0
    %1587 = vmatprep.subr.mxu0 0.0
    %1588 = vmatpush1.msra.mxu0 0.0
    %1589 = vmatprep.subr.mxu0 0.0
    %1590 = vmatpush1.msra.mxu0 0.0
    %1591 = vmatprep.subr.mxu0 0.0
    %1592 = vmatpush1.msra.mxu0 0.0
    %1593 = vmatprep.subr.mxu0 0.0
    %1594 = vmatpush1.msra.mxu0 0.0
    %1595 = vmatprep.subr.mxu0 0.0
    %1596 = vmatpush1.msra.mxu0 0.0
    %1597 = vmatprep.subr.mxu0 0.0
    %1598 = vmatpush1.msra.mxu0 0.0
    %1599 = vmatprep.subr.mxu0 0.0
    %1600 = vmatpush1.msra.mxu0 0.0
    %1601 = vmatprep.subr.mxu0 0.0
    %1602 = vmatpush1.msra.mxu0 0.0
    %1603 = vmatprep.subr.mxu0 0.0
    %1604 = vmatpush1.msra.mxu0 0.0
    %1605 = vmatprep.subr.mxu0 0.0
    %1606 = vmatpush1.msra.mxu0 0.0
    %1607 = vmatprep.subr.mxu0 0.0
    %1608 = vmatpush1.msra.mxu0 0.0
    %1609 = vmatprep.subr.mxu0 0.0
    %1610 = vmatpush1.msra.mxu0 0.0
    %1611 = vmatprep.subr.mxu0 0.0
    %1612 = vmatpush1.msra.mxu0 0.0
    %1613 = vmatprep.subr.mxu0 0.0
    %1614 = vmatpush1.msra.mxu0 0.0
    %1615 = vmatprep.subr.mxu0 0.0
    %1616 = vmatpush1.msra.mxu0 0.0
    %1617 = vmatprep.subr.mxu0 0.0
    %1618 = vmatpush1.msra.mxu0 0.0
    %1619 = vmatprep.subr.mxu0 0.0
    %1620 = vmatpush1.msra.mxu0 0.0
    %1621 = vmatprep.subr.mxu0 0.0
    %1622 = vmatpush1.msra.mxu0 0.0
    %1623 = vmatprep.subr.mxu0 0.0
    %1624 = vmatpush1.msra.mxu0 0.0
    %1625 = vmatprep.subr.mxu0 0.0
    %1626 = vmatpush1.msra.mxu0 0.0
    %1627 = vmatprep.subr.mxu0 0.0
    %1628 = vmatpush1.msra.mxu0 0.0
    %1629 = vmatprep.subr.mxu0 0.0
    %1630 = vmatpush1.msra.mxu0 0.0
    %1631 = vmatprep.subr.mxu0 0.0
    %1632 = vmatpush1.msra.mxu0 0.0
    %1633 = vmatprep.subr.mxu0 0.0
    %1634 = vmatpush1.msra.mxu0 0.0
    %1635 = vmatprep.subr.mxu0 0.0
    %1636 = vmatpush1.msra.mxu0 0.0
    %1637 = vmatprep.subr.mxu0 0.0
    %1638 = vmatpush1.msra.mxu0 0.0
    %1639 = vmatprep.mubr.f32.mxu0 0.0
    %1640 = vmatmul.mubr.f32.gmra.mrb[0].mxu0 %v1573
    %v1641 = vpop.f32.mrb[0].mxu0
    %v1642 = vadd.f32 %v1571, %v1641
    %v1643 = vpop.f32.mrb[0].mxu0
    %1644 = vdwg.mxu0
    %v1645 = vxor.u32 %v1642, 2147483648
    %v1646 = vmul.f32 %v1645, 1.442695
    %v1647 = vpow.pop %v1646
    %v1648 = vadd.f32 %v1647, 1.0
    %v1649 = vrcp.pop %v1648
    %v1650 = vmul.f32 1.0, %v1649
    %v1651 = vmul.f32 %v1642, %v1650
    %v1652 = vld [vmem:[%s13] sm:$0xff]
    %v1653 = vld [vmem:[%s13 + $0x8] sm:$0xff]
    %v1654 = vld [vmem:[%s14] sm:$0x1]
    %v1656 = vsel %vm809, %v1651, 0
    %1658 = vmatprep.subr.mxu0 0.0
    %1659 = vmatpush1.msra.mxu0 %v1652
    %1660 = vmatprep.subr.mxu0 0.0
    %1661 = vmatpush1.msra.mxu0 %v1653
    %1662 = vmatprep.subr.mxu0 0.0
    %1663 = vmatpush1.msra.mxu0 0.0
    %1664 = vmatprep.subr.mxu0 0.0
    %1665 = vmatpush1.msra.mxu0 0.0
    %1666 = vmatprep.subr.mxu0 0.0
    %1667 = vmatpush1.msra.mxu0 0.0
    %1668 = vmatprep.subr.mxu0 0.0
    %1669 = vmatpush1.msra.mxu0 0.0
    %1670 = vmatprep.subr.mxu0 0.0
    %1671 = vmatpush1.msra.mxu0 0.0
    %1672 = vmatprep.subr.mxu0 0.0
    %1673 = vmatpush1.msra.mxu0 0.0
    %1674 = vmatprep.subr.mxu0 0.0
    %1675 = vmatpush1.msra.mxu0 0.0
    %1676 = vmatprep.subr.mxu0 0.0
    %1677 = vmatpush1.msra.mxu0 0.0
    %1678 = vmatprep.subr.mxu0 0.0
    %1679 = vmatpush1.msra.mxu0 0.0
    %1680 = vmatprep.subr.mxu0 0.0
    %1681 = vmatpush1.msra.mxu0 0.0
    %1682 = vmatprep.subr.mxu0 0.0
    %1683 = vmatpush1.msra.mxu0 0.0
    %1684 = vmatprep.subr.mxu0 0.0
    %1685 = vmatpush1.msra.mxu0 0.0
    %1686 = vmatprep.subr.mxu0 0.0
    %1687 = vmatpush1.msra.mxu0 0.0
    %1688 = vmatprep.subr.mxu0 0.0
    %1689 = vmatpush1.msra.mxu0 0.0
    %1690 = vmatprep.subr.mxu0 0.0
    %1691 = vmatpush1.msra.mxu0 0.0
    %1692 = vmatprep.subr.mxu0 0.0
    %1693 = vmatpush1.msra.mxu0 0.0
    %1694 = vmatprep.subr.mxu0 0.0
    %1695 = vmatpush1.msra.mxu0 0.0
    %1696 = vmatprep.subr.mxu0 0.0
    %1697 = vmatpush1.msra.mxu0 0.0
    %1698 = vmatprep.subr.mxu0 0.0
    %1699 = vmatpush1.msra.mxu0 0.0
    %1700 = vmatprep.subr.mxu0 0.0
    %1701 = vmatpush1.msra.mxu0 0.0
    %1702 = vmatprep.subr.mxu0 0.0
    %1703 = vmatpush1.msra.mxu0 0.0
    %1704 = vmatprep.subr.mxu0 0.0
    %1705 = vmatpush1.msra.mxu0 0.0
    %1706 = vmatprep.subr.mxu0 0.0
    %1707 = vmatpush1.msra.mxu0 0.0
    %1708 = vmatprep.subr.mxu0 0.0
    %1709 = vmatpush1.msra.mxu0 0.0
    %1710 = vmatprep.subr.mxu0 0.0
    %1711 = vmatpush1.msra.mxu0 0.0
    %1712 = vmatprep.subr.mxu0 0.0
    %1713 = vmatpush1.msra.mxu0 0.0
    %1714 = vmatprep.subr.mxu0 0.0
    %1715 = vmatpush1.msra.mxu0 0.0
    %1716 = vmatprep.subr.mxu0 0.0
    %1717 = vmatpush1.msra.mxu0 0.0
    %1718 = vmatprep.subr.mxu0 0.0
    %1719 = vmatpush1.msra.mxu0 0.0
    %1720 = vmatprep.subr.mxu0 0.0
    %1721 = vmatpush1.msra.mxu0 0.0
    %1722 = vmatprep.mubr.f32.mxu0 0.0
    %1723 = vmatmul.mubr.f32.gmra.mrb[0].mxu0 %v1656
    %v1724 = vpop.f32.mrb[0].mxu0
    %v1725 = vadd.f32 %v1654, %v1724
    %v1726 = vpop.f32.mrb[0].mxu0
    %1727 = vdwg.mxu0
    %v1728 = vsel %vm883, %v1725, -inf
    %1729 = vmax.xlane.f32.xlu0 %v1728
    %v1730 = vpop.xlane.xlu0 %1729
    %v1731 = vsub.f32 %v1725, %v1730
    %v1732 = vmul.f32 %v1731, 1.442695
    %v1733 = vpow.pop %v1732
    %v1734 = vsel %vm883, %v1733, 0.0
    %1735 = vadd.xlane.f32.xlu0 %v1734
    %v1736 = vpop.xlane.xlu0 %1735
    %v1737 = vrcp.pop %v1736
    %v1738 = vmul.f32 %v1733, %v1737
    %1739 = vst.msk [vmem:[#allocation4 + $0x1] sm:$0x1] %vm883, %v1738
    %v1740 = vsel %vm883, %v1738, -inf
    %1741 = vmax.xlane.f32.xlu0 %v1740
    %v1742 = vpop.xlane.xlu0 %1741
    %v1743 = vsub.f32 %v1738, %v1742
    %v1744 = vmul.f32 %v1743, 1.442695
    %v1745 = vpow.pop %v1744
    %v1746 = vsel %vm883, %v1745, 0.0
    %1747 = vadd.xlane.f32.xlu0 %v1746
    %v1748 = vpop.xlane.xlu0 %1747
    %v1749 = vlog2.pop %v1748
    %v1750 = vmul.f32 %v1749, 0.6931472
    %v1751 = vadd.f32 %v1750, %v1742
    %v1753 = vrot.slane %v913, 1
    %v1755 = vmul.f32 %v1738, %v1753
    %v1756 = vsel %vm883, %v1755, 0.0
    %1757 = vadd.xlane.f32.xlu0 %v1756
    %v1758 = vpop.xlane.xlu0 %1757
    %v1759 = vsub.f32 %v1751, %v1758
    %v1760 = vadd.f32 %v919, %v1759
    %v1761 = vmul.f32 %v1760, 0.5
    %vm1762 = vcmask 0
    %1763 = vst.msk [vmem:[#allocation6] sm:$0x1] %vm1762, %v1761
    // Predicated region
    $region62: #{cnn_cls_forward.1} parent=1 // pred_check
      _
    $region63: #{cnn_cls_forward.1} parent=1 // pred_check_branch
      %1765 = sbr.rel (0) target = $region65
    $region64: #{cnn_cls_forward.1} parent=1 // pred_region
      %s1767 = ssub.s32 32, 32
      %1768 = vsyncadd [#allocation5], %s1767
      %s1770 = sshll.u32 [#allocation4], 4
      %s1771 = int_to_ptr.vmem [resolvable:$true] %s1770
      %1773 = dma.vmem_to_hbm [thread:$0]  %s1771, 32, %s15, [#allocation5]
    $region65: #{cnn_cls_forward.1} parent=1 // pred_fallthru
      _
    // Predicated region
    $region66: #{cnn_cls_forward.1} parent=1 // pred_check
      _
    $region67: #{cnn_cls_forward.1} parent=1 // pred_check_branch
      %1775 = sbr.rel (0) target = $region69
    $region68: #{cnn_cls_forward.1} parent=1 // pred_region
      %s1777 = ssub.s32 16, 16
      %1778 = vsyncadd [#allocation7], %s1777
      %s1780 = sshll.u32 [#allocation6], 4
      %s1781 = int_to_ptr.vmem [resolvable:$true] %s1780
      %1783 = dma.vmem_to_hbm [thread:$0]  %s1781, 16, %s16, [#allocation7]
    $region69: #{cnn_cls_forward.1} parent=1 // pred_fallthru
      _
    // Predicated region
    $region70: #{cnn_cls_forward.1} parent=1 // pred_check
      _
    $region71: #{cnn_cls_forward.1} parent=1 // pred_check_branch
      %1785 = sbr.rel (0) target = $region73
    $region72: #{cnn_cls_forward.1} parent=1 // pred_region
      %1786 = dma.done [#allocation5], 32
    $region73: #{cnn_cls_forward.1} parent=1 // pred_fallthru
      _
    // Predicated region
    $region74: #{cnn_cls_forward.1} parent=1 // pred_check
      _
    $region75: #{cnn_cls_forward.1} parent=1 // pred_check_branch
      %1788 = sbr.rel (0) target = $region77
    $region76: #{cnn_cls_forward.1} parent=1 // pred_region
      %1789 = dma.done [#allocation7], 16
    $region77: #{cnn_cls_forward.1} parent=1 // pred_fallthru
      _
    %1790 = vsyncpa [#allocation5], 1
    %1791 = vsyncpa [#allocation7], 1

</llo_original>
